<compile_context>
chip_gen: v6e
topology: v6e:2x2x1
jax: 0.10.0
libtpu: 0.0.40
codegen_flags: <defaults>
</compile_context>

<pallas_src>
import jax
import jax.numpy as jnp
import numpy as np
from jax.experimental import pallas as pl
from jax.experimental.pallas import tpu as pltpu


def qnet_kernel(s_ref, a_ref, w1s_ref, w1a_ref, b1_ref, w2_ref, b2_ref,
                w3_ref, b3_ref, out_ref):
    # s_ref: (num_inputs, TB), a_ref: (num_actions, TB)  -- batch on lanes.
    # w1s: (H, num_inputs), w1a: (H, num_actions), w2: (H, H)  (compute dtype)
    # b1, b2, w3: (H, 1) f32;  b3: (1, 1) f32 scalar in SMEM.
    # fc1 (concat-free): h1 = relu(W1s @ s + W1a @ a + b1)         -> (H, TB)
    h1 = jnp.dot(w1s_ref[...], s_ref[...], preferred_element_type=jnp.float32)
    h1 = h1 + jnp.dot(w1a_ref[...], a_ref[...],
                      preferred_element_type=jnp.float32)
    h1 = jnp.maximum(h1 + b1_ref[...], 0.0)                       # f32 (VPU)

    # fc2: h2 = relu(W2 @ h1 + b2)                                  -> (H, TB)
    h2 = jnp.dot(w2_ref[...], h1.astype(w2_ref.dtype),
                 preferred_element_type=jnp.float32)
    h2 = jnp.maximum(h2 + b2_ref[...], 0.0)                       # f32 (VPU)

    # fc3: single-output linear as VPU multiply + sublane reduction (XLU),
    # skipping a 1-column MXU matmul entirely.                      -> (1, TB)
    q = jnp.sum(h2 * w3_ref[...], axis=0, keepdims=True) + b3_ref[0, 0]
    out_ref[...] = q.astype(out_ref.dtype)


def qnetwork_forward(state, action, params, *, compute_dtype=jnp.bfloat16,
                     tb_max=512):
    """state: (B, num_inputs), action: (B, num_actions) -> (B, 1) float32."""
    w1s, w1a, b1, w2, b2, w3, b3 = params
    B, ni = state.shape
    na = action.shape[1]
    H = w2.shape[0]

    # Wrapper-side layout plumbing only (no concat): transpose to the
    # features-on-sublanes / batch-on-lanes layout and cast storage dtype.
    s_t = state.T.astype(compute_dtype)          # (ni, B)
    a_t = action.T.astype(compute_dtype)         # (na, B)
    w1s_c = w1s.astype(compute_dtype)            # (H, ni)
    w1a_c = w1a.astype(compute_dtype)            # (H, na)
    w2_c = w2.astype(compute_dtype)              # (H, H)
    b1_f = b1.astype(jnp.float32)                # (H, 1)
    b2_f = b2.astype(jnp.float32)                # (H, 1)
    w3_f = w3.astype(jnp.float32)                # (H, 1)
    b3_f = b3.astype(jnp.float32)                # (1, 1) -> SMEM scalar

    # Batch tiling: TB rows of the batch per grid step (lane-dense, multiple of
    # 128 for large B); weights stay resident across steps (constant index_map).
    tb = B if B <= tb_max else tb_max
    nb = pl.cdiv(B, tb)

    grid_spec = pltpu.PrefetchScalarGridSpec(
        num_scalar_prefetch=0,
        grid=(nb,),
        in_specs=[
            pl.BlockSpec((ni, tb), lambda i: (0, i)),     # state^T block
            pl.BlockSpec((na, tb), lambda i: (0, i)),     # action^T block
            pl.BlockSpec((H, ni), lambda i: (0, 0)),      # W1 (state part)
            pl.BlockSpec((H, na), lambda i: (0, 0)),      # W1 (action part)
            pl.BlockSpec((H, 1), lambda i: (0, 0)),       # b1
            pl.BlockSpec((H, H), lambda i: (0, 0)),       # W2
            pl.BlockSpec((H, 1), lambda i: (0, 0)),       # b2
            pl.BlockSpec((H, 1), lambda i: (0, 0)),       # w3 (column)
            pl.BlockSpec(memory_space=pltpu.MemorySpace.SMEM),  # b3 scalar
        ],
        out_specs=pl.BlockSpec((1, tb), lambda i: (0, i)),       # lane-dense Q
    )

    q_t = pl.pallas_call(
        qnet_kernel,
        out_shape=jax.ShapeDtypeStruct((1, B), jnp.float32),
        grid_spec=grid_spec,
        compiler_params=pltpu.CompilerParams(
            dimension_semantics=("parallel",),
        ),
    )(s_t, a_t, w1s_c, w1a_c, b1_f, w2_c, b2_f, w3_f, b3_f)

    return q_t.T                                  # (B, 1), PyTorch layout


def init_params(key, num_inputs, num_actions, hidden_size):
    """nn.Linear-style U(-1/sqrt(fan_in), 1/sqrt(fan_in)) init.

    Weights are kept in PyTorch (out_features, in_features) orientation so the
    kernel can compute W @ x^T directly; fc1's weight is pre-split into its
    state and action column blocks (removes the runtime concat)."""
    d_in = num_inputs + num_actions
    ks = jax.random.split(key, 6)

    def lin(kw, kb, fan_in, fan_out):
        bound = 1.0 / np.sqrt(fan_in)
        w = jax.random.uniform(kw, (fan_out, fan_in), jnp.float32, -bound, bound)
        b = jax.random.uniform(kb, (fan_out, 1), jnp.float32, -bound, bound)
        return w, b

    w1, b1 = lin(ks[0], ks[1], d_in, hidden_size)     # (H, D), (H, 1)
    w2, b2 = lin(ks[2], ks[3], hidden_size, hidden_size)
    w3, b3 = lin(ks[4], ks[5], hidden_size, 1)        # (1, H), (1, 1)

    w1s = w1[:, :num_inputs]                          # (H, num_inputs)
    w1a = w1[:, num_inputs:]                          # (H, num_actions)
    w3_col = w3.T                                     # (H, 1)
    return (w1s, w1a, b1, w2, b2, w3_col, b3)


def qnetwork_reference(state, action, params):
    """Pure-JAX f32 reference matching the PyTorch forward."""
    w1s, w1a, b1, w2, b2, w3, b3 = params
    x = jnp.concatenate([state, action], axis=1)
    w1 = jnp.concatenate([w1s, w1a], axis=1)
    h1 = jnp.maximum(x @ w1.T + b1[:, 0], 0.0)
    h2 = jnp.maximum(h1 @ w2.T + b2[:, 0], 0.0)
    return h2 @ w3 + b3[0, 0]                         # (B, 1)


if __name__ == "__main__":
    key = jax.random.PRNGKey(0)
    k_params, k_s1, k_a1, k_s2, k_a2 = jax.random.split(key, 5)

    num_inputs, num_actions, hidden_size = 12, 4, 256   # module default hidden
    params = init_params(k_params, num_inputs, num_actions, hidden_size)

    # Case 1: tiny batch (single grid step, TB == B), f32 compute, tight check.
    B1 = 8
    state1 = jax.random.normal(k_s1, (B1, num_inputs), jnp.float32)
    action1 = jax.random.normal(k_a1, (B1, num_actions), jnp.float32)
    q1 = qnetwork_forward(state1, action1, params, compute_dtype=jnp.float32)
    q1 = jax.block_until_ready(q1)
    q1_ref = qnetwork_reference(state1, action1, params)
    np.testing.assert_allclose(np.asarray(q1), np.asarray(q1_ref),
                               rtol=1e-5, atol=1e-5)

    # Case 2: realistic batch spanning multiple grid steps, bf16 storage
    # (default), lane-dense (1, B) output, looser tolerance for bf16 rounding.
    B2 = 1024
    state2 = jax.random.normal(k_s2, (B2, num_inputs), jnp.float32)
    action2 = jax.random.normal(k_a2, (B2, num_actions), jnp.float32)
    q2 = qnetwork_forward(state2, action2, params)      # bf16 compute dtype
    q2 = jax.block_until_ready(q2)
    q2_ref = qnetwork_reference(state2, action2, params)
    np.testing.assert_allclose(np.asarray(q2), np.asarray(q2_ref),
                               rtol=5e-2, atol=5e-2)

    print("KERNEL_OK")
</pallas_src>

<mosaic_0001>
module attributes {stable_mosaic.version = 11 : i64} {
  func.func @qnet_kernel(%arg0: i32, %arg1: memref<12x8xf32, #tpu.memory_space<vmem>>, %arg2: memref<4x8xf32, #tpu.memory_space<vmem>>, %arg3: memref<256x12xf32, #tpu.memory_space<vmem>>, %arg4: memref<256x4xf32, #tpu.memory_space<vmem>>, %arg5: memref<256x1xf32, #tpu.memory_space<vmem>>, %arg6: memref<256x256xf32, #tpu.memory_space<vmem>>, %arg7: memref<256x1xf32, #tpu.memory_space<vmem>>, %arg8: memref<256x1xf32, #tpu.memory_space<vmem>>, %arg9: memref<1x1xf32, #tpu.memory_space<smem>>, %arg10: memref<1x8xf32, #tpu.memory_space<vmem>>) attributes {dimension_semantics = [#tpu.dimension_semantics<parallel>], iteration_bounds = array<i64: 1>, scalar_prefetch = 0 : i64, scratch_operands = 0 : i64, tpu.core_type = #tpu.core_type<tc>, window_params = [{transform_indices = @transform_0, window_bounds = array<i64: 12, 8>}, {transform_indices = @transform_1, window_bounds = array<i64: 4, 8>}, {pipeline_mode = #tpu.pipeline_mode<synchronous>, transform_indices = @transform_2, window_bounds = array<i64: 256, 12>}, {pipeline_mode = #tpu.pipeline_mode<synchronous>, transform_indices = @transform_3, window_bounds = array<i64: 256, 4>}, {pipeline_mode = #tpu.pipeline_mode<synchronous>, transform_indices = @transform_4, window_bounds = array<i64: 256, 1>}, {pipeline_mode = #tpu.pipeline_mode<synchronous>, transform_indices = @transform_5, window_bounds = array<i64: 256, 256>}, {pipeline_mode = #tpu.pipeline_mode<synchronous>, transform_indices = @transform_6, window_bounds = array<i64: 256, 1>}, {pipeline_mode = #tpu.pipeline_mode<synchronous>, transform_indices = @transform_7, window_bounds = array<i64: 256, 1>}, {transform_indices = @transform_8, window_bounds = array<i64: 1, 1>}, {transform_indices = @transform_9, window_bounds = array<i64: 1, 8>}]} {
    %c0 = arith.constant 0 : index
    %c0_0 = arith.constant 0 : index
    %0 = vector.load %arg3[%c0, %c0_0] : memref<256x12xf32, #tpu.memory_space<vmem>>, vector<256x12xf32>
    %c0_1 = arith.constant 0 : index
    %c0_2 = arith.constant 0 : index
    %1 = vector.load %arg1[%c0_1, %c0_2] : memref<12x8xf32, #tpu.memory_space<vmem>>, vector<12x8xf32>
    %cst = arith.constant dense<0.000000e+00> : vector<256x8xf32>
    %2 = tpu.matmul %0, %1, %cst {dimension_numbers = #tpu.dot_dimension_numbers<[1], [0], [0], [1], [0, 0, 1, 1], [], []>} : vector<256x12xf32>, vector<12x8xf32>, vector<256x8xf32> -> vector<256x8xf32>
    %c0_3 = arith.constant 0 : index
    %c0_4 = arith.constant 0 : index
    %3 = vector.load %arg4[%c0_3, %c0_4] : memref<256x4xf32, #tpu.memory_space<vmem>>, vector<256x4xf32>
    %c0_5 = arith.constant 0 : index
    %c0_6 = arith.constant 0 : index
    %4 = vector.load %arg2[%c0_5, %c0_6] : memref<4x8xf32, #tpu.memory_space<vmem>>, vector<4x8xf32>
    %cst_7 = arith.constant dense<0.000000e+00> : vector<256x8xf32>
    %5 = tpu.matmul %3, %4, %cst_7 {dimension_numbers = #tpu.dot_dimension_numbers<[1], [0], [0], [1], [0, 0, 1, 1], [], []>} : vector<256x4xf32>, vector<4x8xf32>, vector<256x8xf32> -> vector<256x8xf32>
    %6 = arith.addf %2, %5 : vector<256x8xf32>
    %c0_8 = arith.constant 0 : index
    %c0_9 = arith.constant 0 : index
    %7 = vector.load %arg5[%c0_8, %c0_9] : memref<256x1xf32, #tpu.memory_space<vmem>>, vector<256x1xf32>
    %8 = vector.broadcast %7 : vector<256x1xf32> to vector<256x8xf32>
    %9 = arith.addf %6, %8 : vector<256x8xf32>
    %cst_10 = arith.constant 0.000000e+00 : f32
    %10 = vector.broadcast %cst_10 : f32 to vector<256x8xf32>
    %11 = arith.maximumf %9, %10 : vector<256x8xf32>
    %c0_11 = arith.constant 0 : index
    %c0_12 = arith.constant 0 : index
    %12 = vector.load %arg6[%c0_11, %c0_12] : memref<256x256xf32, #tpu.memory_space<vmem>>, vector<256x256xf32>
    %cst_13 = arith.constant dense<0.000000e+00> : vector<256x8xf32>
    %13 = tpu.matmul %12, %11, %cst_13 {dimension_numbers = #tpu.dot_dimension_numbers<[1], [0], [0], [1], [0, 0, 1, 1], [], []>} : vector<256x256xf32>, vector<256x8xf32>, vector<256x8xf32> -> vector<256x8xf32>
    %c0_14 = arith.constant 0 : index
    %c0_15 = arith.constant 0 : index
    %14 = vector.load %arg7[%c0_14, %c0_15] : memref<256x1xf32, #tpu.memory_space<vmem>>, vector<256x1xf32>
    %15 = vector.broadcast %14 : vector<256x1xf32> to vector<256x8xf32>
    %16 = arith.addf %13, %15 : vector<256x8xf32>
    %cst_16 = arith.constant 0.000000e+00 : f32
    %17 = vector.broadcast %cst_16 : f32 to vector<256x8xf32>
    %18 = arith.maximumf %16, %17 : vector<256x8xf32>
    %c0_17 = arith.constant 0 : index
    %c0_18 = arith.constant 0 : index
    %19 = vector.load %arg8[%c0_17, %c0_18] : memref<256x1xf32, #tpu.memory_space<vmem>>, vector<256x1xf32>
    %20 = vector.broadcast %19 : vector<256x1xf32> to vector<256x8xf32>
    %21 = arith.mulf %18, %20 : vector<256x8xf32>
    %cst_19 = arith.constant dense<0.000000e+00> : vector<8xf32>
    %22 = vector.multi_reduction <add>, %21, %cst_19 [0] : vector<256x8xf32> to vector<8xf32>
    %23 = vector.shape_cast %22 : vector<8xf32> to vector<1x8xf32>
    %c0_20 = arith.constant 0 : index
    %c0_21 = arith.constant 0 : index
    %24 = memref.load %arg9[%c0_20, %c0_21] : memref<1x1xf32, #tpu.memory_space<smem>>
    %25 = vector.broadcast %24 : f32 to vector<1x8xf32>
    %26 = arith.addf %23, %25 : vector<1x8xf32>
    %c0_22 = arith.constant 0 : index
    %c0_23 = arith.constant 0 : index
    %27 = vector.load %arg10[%c0_22, %c0_23] : memref<1x8xf32, #tpu.memory_space<vmem>>, vector<1x8xf32>
    tpu.vector_store %arg10[%c0_22, %c0_23], %26 {strides = array<i32>} : memref<1x8xf32, #tpu.memory_space<vmem>>, vector<1x8xf32>,
    return
  }
  func.func @transform_0(%arg0: i32) -> (i32, i32) {
    %c0_i32 = arith.constant 0 : i32
    %c0_i32_0 = arith.constant 0 : i32
    return %c0_i32, %arg0 : i32, i32
  }
  func.func @transform_1(%arg0: i32) -> (i32, i32) {
    %c0_i32 = arith.constant 0 : i32
    %c0_i32_0 = arith.constant 0 : i32
    return %c0_i32, %arg0 : i32, i32
  }
  func.func @transform_2(%arg0: i32) -> (i32, i32) {
    %c0_i32 = arith.constant 0 : i32
    %c0_i32_0 = arith.constant 0 : i32
    %c0_i32_1 = arith.constant 0 : i32
    return %c0_i32, %c0_i32_0 : i32, i32
  }
  func.func @transform_3(%arg0: i32) -> (i32, i32) {
    %c0_i32 = arith.constant 0 : i32
    %c0_i32_0 = arith.constant 0 : i32
    %c0_i32_1 = arith.constant 0 : i32
    return %c0_i32, %c0_i32_0 : i32, i32
  }
  func.func @transform_4(%arg0: i32) -> (i32, i32) {
    %c0_i32 = arith.constant 0 : i32
    %c0_i32_0 = arith.constant 0 : i32
    %c0_i32_1 = arith.constant 0 : i32
    return %c0_i32, %c0_i32_0 : i32, i32
  }
  func.func @transform_5(%arg0: i32) -> (i32, i32) {
    %c0_i32 = arith.constant 0 : i32
    %c0_i32_0 = arith.constant 0 : i32
    %c0_i32_1 = arith.constant 0 : i32
    return %c0_i32, %c0_i32_0 : i32, i32
  }
  func.func @transform_6(%arg0: i32) -> (i32, i32) {
    %c0_i32 = arith.constant 0 : i32
    %c0_i32_0 = arith.constant 0 : i32
    %c0_i32_1 = arith.constant 0 : i32
    return %c0_i32, %c0_i32_0 : i32, i32
  }
  func.func @transform_7(%arg0: i32) -> (i32, i32) {
    %c0_i32 = arith.constant 0 : i32
    %c0_i32_0 = arith.constant 0 : i32
    %c0_i32_1 = arith.constant 0 : i32
    return %c0_i32, %c0_i32_0 : i32, i32
  }
  func.func @transform_8(%arg0: i32) -> (i32, i32) {
    %c0_i32 = arith.constant 0 : i32
    %c0_i32_0 = arith.constant 0 : i32
    %c0_i32_1 = arith.constant 0 : i32
    return %c0_i32, %c0_i32_0 : i32, i32
  }
  func.func @transform_9(%arg0: i32) -> (i32, i32) {
    %c0_i32 = arith.constant 0 : i32
    %c0_i32_0 = arith.constant 0 : i32
    return %c0_i32, %arg0 : i32, i32
  }
}

</mosaic_0001>

<llo_original>
// kernel: tpu_custom_call.1
$region0: #{tpu_custom_call.1}
  #allocation0 [shape = 'u32[]', space=smem, size = 0x4, offset = 0x4, fixed_abs, tag = 'smem constant byte address 0x4 - core index']
  #allocation1 [shape = 'u32[144,128]{1,0:T(1,128)}', space=vmem, size = 0x12000, scoped, tag = 'internal scratch']
  #allocation2 [shape = 'f32[1,1]{1,0:T(1,128)S(6)}', space=smem, size = 0x200, scoped, tag = 'scoped memory for tpu_custom_call.1']
  %s0 = inlined_call_operand.vmem [shape: f32[12,8], index: 0, kind: input, shape index: {}]
  %s1 = inlined_call_operand.vmem [shape: f32[4,8], index: 1, kind: input, shape index: {}]
  %s2 = inlined_call_operand.vmem [shape: f32[256,12], index: 2, kind: input, shape index: {}]
  %s3 = inlined_call_operand.vmem [shape: f32[256,4], index: 3, kind: input, shape index: {}]
  %s4 = inlined_call_operand.vmem [shape: f32[256,1], index: 4, kind: input, shape index: {}]
  %s5 = inlined_call_operand.vmem [shape: f32[256,256], index: 5, kind: input, shape index: {}]
  %s6 = inlined_call_operand.vmem [shape: f32[256,1], index: 6, kind: input, shape index: {}]
  %s7 = inlined_call_operand.vmem [shape: f32[256,1], index: 7, kind: input, shape index: {}]
  %s8 = inlined_call_operand.<no memory space> [shape: f32[1,1], index: 8, kind: input, shape index: {}]
  %s9 = inlined_call_operand.hbm [shape: f32[1,8], index: 9, kind: output, shape index: {}]
  %s10 = sld [smem:[#allocation0]]
  $region46: #{tpu_custom_call.1} parent=0
    _
  %s12 = ssub.s32 1, %s10
  %s13 = scalar_select 0, %s12, %s10
  %14 = sst [smem:[#allocation2]] %s8
  $region1: #{tpu_custom_call.1} parent=0
    #allocation3 [shape = 'u8[512]{0}', space=vmem, size = 0x400, scoped, tag = 'output window, operand 0, single buffered']
    #allocation4 [shape = 's32[1]{0}', space=sflag, size = 0x4, scoped, tag = 'scoped memory for tpu_custom_call.1']
    %15 = vsyncpa [#allocation4], 0
    // Predicated region
    $region2: #{tpu_custom_call.1} parent=1 // pred_check
      _
    $region3: #{tpu_custom_call.1} parent=1 // pred_check_branch
      %17 = sbr.rel (0) target = $region5
    $region4: #{tpu_custom_call.1} parent=1 // pred_region
      _
    $region5: #{tpu_custom_call.1} parent=1 // pred_fallthru
      _
    // Predicated region
    $region6: #{tpu_custom_call.1} parent=1 // pred_check
      _
    $region7: #{tpu_custom_call.1} parent=1 // pred_check_branch
      %19 = sbr.rel (0) target = $region9
    $region8: #{tpu_custom_call.1} parent=1 // pred_region
      _
    $region9: #{tpu_custom_call.1} parent=1 // pred_fallthru
      _
    // Predicated region
    $region10: #{tpu_custom_call.1} parent=1 // pred_check
      _
    $region11: #{tpu_custom_call.1} parent=1 // pred_check_branch
      %21 = sbr.rel (0) target = $region13
    $region12: #{tpu_custom_call.1} parent=1 // pred_region
      _
    $region13: #{tpu_custom_call.1} parent=1 // pred_fallthru
      _
    // Predicated region
    $region14: #{tpu_custom_call.1} parent=1 // pred_check
      _
    $region15: #{tpu_custom_call.1} parent=1 // pred_check_branch
      %23 = sbr.rel (0) target = $region17
    $region16: #{tpu_custom_call.1} parent=1 // pred_region
      _
    $region17: #{tpu_custom_call.1} parent=1 // pred_fallthru
      _
    // Predicated region
    $region18: #{tpu_custom_call.1} parent=1 // pred_check
      _
    $region19: #{tpu_custom_call.1} parent=1 // pred_check_branch
      %25 = sbr.rel (0) target = $region21
    $region20: #{tpu_custom_call.1} parent=1 // pred_region
      _
    $region21: #{tpu_custom_call.1} parent=1 // pred_fallthru
      _
    // Predicated region
    $region22: #{tpu_custom_call.1} parent=1 // pred_check
      _
    $region23: #{tpu_custom_call.1} parent=1 // pred_check_branch
      %27 = sbr.rel (0) target = $region25
    $region24: #{tpu_custom_call.1} parent=1 // pred_region
      _
    $region25: #{tpu_custom_call.1} parent=1 // pred_fallthru
      _
    // Predicated region
    $region26: #{tpu_custom_call.1} parent=1 // pred_check
      _
    $region27: #{tpu_custom_call.1} parent=1 // pred_check_branch
      %29 = sbr.rel (0) target = $region29
    $region28: #{tpu_custom_call.1} parent=1 // pred_region
      _
    $region29: #{tpu_custom_call.1} parent=1 // pred_fallthru
      _
    // Predicated region
    $region30: #{tpu_custom_call.1} parent=1 // pred_check
      _
    $region31: #{tpu_custom_call.1} parent=1 // pred_check_branch
      %31 = sbr.rel (0) target = $region33
    $region32: #{tpu_custom_call.1} parent=1 // pred_region
      _
    $region33: #{tpu_custom_call.1} parent=1 // pred_fallthru
      _
    // Predicated region
    $region34: #{tpu_custom_call.1} parent=1 // pred_check
      _
    $region35: #{tpu_custom_call.1} parent=1 // pred_check_branch
      %33 = sbr.rel (0) target = $region37
    $region36: #{tpu_custom_call.1} parent=1 // pred_region
      _
    $region37: #{tpu_custom_call.1} parent=1 // pred_fallthru
      _
    %v34 = vld [vmem:[%s2] sm:$0xff]
    %v35 = vld [vmem:[%s2 + $0x8] sm:$0xff]
    %v36 = vld [vmem:[%s2 + $0x10] sm:$0xff]
    %v37 = vld [vmem:[%s2 + $0x18] sm:$0xff]
    %v38 = vld [vmem:[%s2 + $0x20] sm:$0xff]
    %v39 = vld [vmem:[%s2 + $0x28] sm:$0xff]
    %v40 = vld [vmem:[%s2 + $0x30] sm:$0xff]
    %v41 = vld [vmem:[%s2 + $0x38] sm:$0xff]
    %v42 = vld [vmem:[%s2 + $0x40] sm:$0xff]
    %v43 = vld [vmem:[%s2 + $0x48] sm:$0xff]
    %v44 = vld [vmem:[%s2 + $0x50] sm:$0xff]
    %v45 = vld [vmem:[%s2 + $0x58] sm:$0xff]
    %v46 = vld [vmem:[%s2 + $0x60] sm:$0xff]
    %v47 = vld [vmem:[%s2 + $0x68] sm:$0xff]
    %v48 = vld [vmem:[%s2 + $0x70] sm:$0xff]
    %v49 = vld [vmem:[%s2 + $0x78] sm:$0xff]
    %v50 = vld [vmem:[%s2 + $0x80] sm:$0xff]
    %v51 = vld [vmem:[%s2 + $0x88] sm:$0xff]
    %v52 = vld [vmem:[%s2 + $0x90] sm:$0xff]
    %v53 = vld [vmem:[%s2 + $0x98] sm:$0xff]
    %v54 = vld [vmem:[%s2 + $0xa0] sm:$0xff]
    %v55 = vld [vmem:[%s2 + $0xa8] sm:$0xff]
    %v56 = vld [vmem:[%s2 + $0xb0] sm:$0xff]
    %v57 = vld [vmem:[%s2 + $0xb8] sm:$0xff]
    %v58 = vld [vmem:[%s2 + $0xc0] sm:$0xff]
    %v59 = vld [vmem:[%s2 + $0xc8] sm:$0xff]
    %v60 = vld [vmem:[%s2 + $0xd0] sm:$0xff]
    %v61 = vld [vmem:[%s2 + $0xd8] sm:$0xff]
    %v62 = vld [vmem:[%s2 + $0xe0] sm:$0xff]
    %v63 = vld [vmem:[%s2 + $0xe8] sm:$0xff]
    %v64 = vld [vmem:[%s2 + $0xf0] sm:$0xff]
    %v65 = vld [vmem:[%s2 + $0xf8] sm:$0xff]
    %v66 = vld [vmem:[%s0] sm:$0xff]
    %v67 = vld [vmem:[%s0 + $0x8] sm:$0xf]
    %v68 = vld [vmem:[%s3] sm:$0xff]
    %v69 = vld [vmem:[%s3 + $0x8] sm:$0xff]
    %v70 = vld [vmem:[%s3 + $0x10] sm:$0xff]
    %v71 = vld [vmem:[%s3 + $0x18] sm:$0xff]
    %v72 = vld [vmem:[%s3 + $0x20] sm:$0xff]
    %v73 = vld [vmem:[%s3 + $0x28] sm:$0xff]
    %v74 = vld [vmem:[%s3 + $0x30] sm:$0xff]
    %v75 = vld [vmem:[%s3 + $0x38] sm:$0xff]
    %v76 = vld [vmem:[%s3 + $0x40] sm:$0xff]
    %v77 = vld [vmem:[%s3 + $0x48] sm:$0xff]
    %v78 = vld [vmem:[%s3 + $0x50] sm:$0xff]
    %v79 = vld [vmem:[%s3 + $0x58] sm:$0xff]
    %v80 = vld [vmem:[%s3 + $0x60] sm:$0xff]
    %v81 = vld [vmem:[%s3 + $0x68] sm:$0xff]
    %v82 = vld [vmem:[%s3 + $0x70] sm:$0xff]
    %v83 = vld [vmem:[%s3 + $0x78] sm:$0xff]
    %v84 = vld [vmem:[%s3 + $0x80] sm:$0xff]
    %v85 = vld [vmem:[%s3 + $0x88] sm:$0xff]
    %v86 = vld [vmem:[%s3 + $0x90] sm:$0xff]
    %v87 = vld [vmem:[%s3 + $0x98] sm:$0xff]
    %v88 = vld [vmem:[%s3 + $0xa0] sm:$0xff]
    %v89 = vld [vmem:[%s3 + $0xa8] sm:$0xff]
    %v90 = vld [vmem:[%s3 + $0xb0] sm:$0xff]
    %v91 = vld [vmem:[%s3 + $0xb8] sm:$0xff]
    %v92 = vld [vmem:[%s3 + $0xc0] sm:$0xff]
    %v93 = vld [vmem:[%s3 + $0xc8] sm:$0xff]
    %v94 = vld [vmem:[%s3 + $0xd0] sm:$0xff]
    %v95 = vld [vmem:[%s3 + $0xd8] sm:$0xff]
    %v96 = vld [vmem:[%s3 + $0xe0] sm:$0xff]
    %v97 = vld [vmem:[%s3 + $0xe8] sm:$0xff]
    %v98 = vld [vmem:[%s3 + $0xf0] sm:$0xff]
    %v99 = vld [vmem:[%s3 + $0xf8] sm:$0xff]
    %v100 = vld [vmem:[%s1] sm:$0xf]
    %vm101 = vcmask 31744
    %v103 = vsel %vm101, %v68, 0
    %v106 = vsel %vm101, %v69, 0
    %v109 = vsel %vm101, %v70, 0
    %v112 = vsel %vm101, %v71, 0
    %v115 = vsel %vm101, %v72, 0
    %v118 = vsel %vm101, %v73, 0
    %v121 = vsel %vm101, %v74, 0
    %v124 = vsel %vm101, %v75, 0
    %v127 = vsel %vm101, %v76, 0
    %v130 = vsel %vm101, %v77, 0
    %v133 = vsel %vm101, %v78, 0
    %v136 = vsel %vm101, %v79, 0
    %v139 = vsel %vm101, %v80, 0
    %v142 = vsel %vm101, %v81, 0
    %v145 = vsel %vm101, %v82, 0
    %v148 = vsel %vm101, %v83, 0
    %v151 = vsel %vm101, %v84, 0
    %v154 = vsel %vm101, %v85, 0
    %v157 = vsel %vm101, %v86, 0
    %v160 = vsel %vm101, %v87, 0
    %v163 = vsel %vm101, %v88, 0
    %v166 = vsel %vm101, %v89, 0
    %v169 = vsel %vm101, %v90, 0
    %v172 = vsel %vm101, %v91, 0
    %v175 = vsel %vm101, %v92, 0
    %v178 = vsel %vm101, %v93, 0
    %v181 = vsel %vm101, %v94, 0
    %v184 = vsel %vm101, %v95, 0
    %v187 = vsel %vm101, %v96, 0
    %v190 = vsel %vm101, %v97, 0
    %v193 = vsel %vm101, %v98, 0
    %v196 = vsel %vm101, %v99, 0
    %vm198 = vcmask 1043456
    %v200 = vsel %vm198, %v100, 0
    %202 = vmatprep.subr.mxu0 0.0
    %203 = vmatpush1.msra.mxu0 0.0
    %204 = vmatprep.subr.mxu0 0.0
    %205 = vmatpush1.msra.mxu0 0.0
    %206 = vmatprep.subr.mxu0 0.0
    %207 = vmatpush1.msra.mxu0 0.0
    %208 = vmatprep.subr.mxu0 0.0
    %209 = vmatpush1.msra.mxu0 0.0
    %210 = vmatprep.subr.mxu0 0.0
    %211 = vmatpush1.msra.mxu0 0.0
    %212 = vmatprep.subr.mxu0 0.0
    %213 = vmatpush1.msra.mxu0 0.0
    %214 = vmatprep.subr.mxu0 0.0
    %215 = vmatpush1.msra.mxu0 0.0
    %216 = vmatprep.subr.mxu0 0.0
    %217 = vmatpush1.msra.mxu0 0.0
    %218 = vmatprep.subr.mxu0 0.0
    %219 = vmatpush1.msra.mxu0 0.0
    %220 = vmatprep.subr.mxu0 0.0
    %221 = vmatpush1.msra.mxu0 0.0
    %222 = vmatprep.subr.mxu0 0.0
    %223 = vmatpush1.msra.mxu0 0.0
    %224 = vmatprep.subr.mxu0 0.0
    %225 = vmatpush1.msra.mxu0 0.0
    %226 = vmatprep.subr.mxu0 0.0
    %227 = vmatpush1.msra.mxu0 0.0
    %228 = vmatprep.subr.mxu0 0.0
    %229 = vmatpush1.msra.mxu0 0.0
    %230 = vmatprep.subr.mxu0 0.0
    %231 = vmatpush1.msra.mxu0 0.0
    %232 = vmatprep.subr.mxu0 0.0
    %233 = vmatpush1.msra.mxu0 %v200
    %234 = vmatprep.subr.mxu0 0.0
    %235 = vmatpush2.msra.mxu0 0.0
    %236 = vmatprep.subr.mxu0 0.0
    %237 = vmatpush2.msra.mxu0 0.0
    %238 = vmatprep.subr.mxu0 0.0
    %239 = vmatpush2.msra.mxu0 0.0
    %240 = vmatprep.subr.mxu0 0.0
    %241 = vmatpush2.msra.mxu0 0.0
    %242 = vmatprep.subr.mxu0 0.0
    %243 = vmatpush2.msra.mxu0 0.0
    %244 = vmatprep.subr.mxu0 0.0
    %245 = vmatpush2.msra.mxu0 0.0
    %246 = vmatprep.subr.mxu0 0.0
    %247 = vmatpush2.msra.mxu0 0.0
    %248 = vmatprep.subr.mxu0 0.0
    %249 = vmatpush2.msra.mxu0 0.0
    %250 = vmatprep.subr.mxu0 0.0
    %251 = vmatpush2.msra.mxu0 0.0
    %252 = vmatprep.subr.mxu0 0.0
    %253 = vmatpush2.msra.mxu0 0.0
    %254 = vmatprep.subr.mxu0 0.0
    %255 = vmatpush2.msra.mxu0 0.0
    %256 = vmatprep.subr.mxu0 0.0
    %257 = vmatpush2.msra.mxu0 0.0
    %258 = vmatprep.subr.mxu0 0.0
    %259 = vmatpush2.msra.mxu0 0.0
    %260 = vmatprep.subr.mxu0 0.0
    %261 = vmatpush2.msra.mxu0 0.0
    %262 = vmatprep.subr.mxu0 0.0
    %263 = vmatpush2.msra.mxu0 0.0
    %264 = vmatprep.subr.mxu0 0.0
    %265 = vmatpush2.msra.mxu0 0.0
    %266 = vmatprep.mubr.f32.mxu0 0.0
    %267 = vmatmul.mubr.f32.gmra.mxu0 %v103
    %v268 = vpop.f32.mrf.mxu0
    %v269 = vadd.f32 0.0, %v268
    %v270 = vpop.f32.mrf.mxu0
    %271 = vmatprep.mubr.f32.mxu0 0.0
    %272 = vmatmul.mubr.f32.gmra.mxu0 %v106
    %v273 = vpop.f32.mrf.mxu0
    %v274 = vadd.f32 0.0, %v273
    %v275 = vpop.f32.mrf.mxu0
    %276 = vmatprep.mubr.f32.mxu0 0.0
    %277 = vmatmul.mubr.f32.gmra.mxu0 %v109
    %v278 = vpop.f32.mrf.mxu0
    %v279 = vadd.f32 0.0, %v278
    %v280 = vpop.f32.mrf.mxu0
    %281 = vmatprep.mubr.f32.mxu0 0.0
    %282 = vmatmul.mubr.f32.gmra.mxu0 %v112
    %v283 = vpop.f32.mrf.mxu0
    %v284 = vadd.f32 0.0, %v283
    %v285 = vpop.f32.mrf.mxu0
    %286 = vmatprep.mubr.f32.mxu0 0.0
    %287 = vmatmul.mubr.f32.gmra.mxu0 %v115
    %v288 = vpop.f32.mrf.mxu0
    %v289 = vadd.f32 0.0, %v288
    %v290 = vpop.f32.mrf.mxu0
    %291 = vmatprep.mubr.f32.mxu0 0.0
    %292 = vmatmul.mubr.f32.gmra.mxu0 %v118
    %v293 = vpop.f32.mrf.mxu0
    %v294 = vadd.f32 0.0, %v293
    %v295 = vpop.f32.mrf.mxu0
    %296 = vmatprep.mubr.f32.mxu0 0.0
    %297 = vmatmul.mubr.f32.gmra.mxu0 %v121
    %v298 = vpop.f32.mrf.mxu0
    %v299 = vadd.f32 0.0, %v298
    %v300 = vpop.f32.mrf.mxu0
    %301 = vmatprep.mubr.f32.mxu0 0.0
    %302 = vmatmul.mubr.f32.gmra.mxu0 %v124
    %v303 = vpop.f32.mrf.mxu0
    %v304 = vadd.f32 0.0, %v303
    %v305 = vpop.f32.mrf.mxu0
    %306 = vmatprep.mubr.f32.mxu0 0.0
    %307 = vmatmul.mubr.f32.gmra.mxu0 %v127
    %v308 = vpop.f32.mrf.mxu0
    %v309 = vadd.f32 0.0, %v308
    %v310 = vpop.f32.mrf.mxu0
    %311 = vmatprep.mubr.f32.mxu0 0.0
    %312 = vmatmul.mubr.f32.gmra.mxu0 %v130
    %v313 = vpop.f32.mrf.mxu0
    %v314 = vadd.f32 0.0, %v313
    %v315 = vpop.f32.mrf.mxu0
    %316 = vmatprep.mubr.f32.mxu0 0.0
    %317 = vmatmul.mubr.f32.gmra.mxu0 %v133
    %v318 = vpop.f32.mrf.mxu0
    %v319 = vadd.f32 0.0, %v318
    %v320 = vpop.f32.mrf.mxu0
    %321 = vmatprep.mubr.f32.mxu0 0.0
    %322 = vmatmul.mubr.f32.gmra.mxu0 %v136
    %v323 = vpop.f32.mrf.mxu0
    %v324 = vadd.f32 0.0, %v323
    %v325 = vpop.f32.mrf.mxu0
    %326 = vmatprep.mubr.f32.mxu0 0.0
    %327 = vmatmul.mubr.f32.gmra.mxu0 %v139
    %v328 = vpop.f32.mrf.mxu0
    %v329 = vadd.f32 0.0, %v328
    %v330 = vpop.f32.mrf.mxu0
    %331 = vmatprep.mubr.f32.mxu0 0.0
    %332 = vmatmul.mubr.f32.gmra.mxu0 %v142
    %v333 = vpop.f32.mrf.mxu0
    %v334 = vadd.f32 0.0, %v333
    %v335 = vpop.f32.mrf.mxu0
    %336 = vmatprep.mubr.f32.mxu0 0.0
    %337 = vmatmul.mubr.f32.gmra.mxu0 %v145
    %v338 = vpop.f32.mrf.mxu0
    %v339 = vadd.f32 0.0, %v338
    %v340 = vpop.f32.mrf.mxu0
    %341 = vmatprep.mubr.f32.mxu0 0.0
    %342 = vmatmul.mubr.f32.gmra.mxu0 %v148
    %v343 = vpop.f32.mrf.mxu0
    %v344 = vadd.f32 0.0, %v343
    %v345 = vpop.f32.mrf.mxu0
    %346 = vmatprep.mubr.f32.mxu0 0.0
    %347 = vmatmul.mubr.f32.gmra.mxu0 %v151
    %v348 = vpop.f32.mrf.mxu0
    %v349 = vadd.f32 0.0, %v348
    %v350 = vpop.f32.mrf.mxu0
    %351 = vmatprep.mubr.f32.mxu0 0.0
    %352 = vmatmul.mubr.f32.gmra.mxu0 %v154
    %v353 = vpop.f32.mrf.mxu0
    %v354 = vadd.f32 0.0, %v353
    %v355 = vpop.f32.mrf.mxu0
    %356 = vmatprep.mubr.f32.mxu0 0.0
    %357 = vmatmul.mubr.f32.gmra.mxu0 %v157
    %v358 = vpop.f32.mrf.mxu0
    %v359 = vadd.f32 0.0, %v358
    %v360 = vpop.f32.mrf.mxu0
    %361 = vmatprep.mubr.f32.mxu0 0.0
    %362 = vmatmul.mubr.f32.gmra.mxu0 %v160
    %v363 = vpop.f32.mrf.mxu0
    %v364 = vadd.f32 0.0, %v363
    %v365 = vpop.f32.mrf.mxu0
    %366 = vmatprep.mubr.f32.mxu0 0.0
    %367 = vmatmul.mubr.f32.gmra.mxu0 %v163
    %v368 = vpop.f32.mrf.mxu0
    %v369 = vadd.f32 0.0, %v368
    %v370 = vpop.f32.mrf.mxu0
    %371 = vmatprep.mubr.f32.mxu0 0.0
    %372 = vmatmul.mubr.f32.gmra.mxu0 %v166
    %v373 = vpop.f32.mrf.mxu0
    %v374 = vadd.f32 0.0, %v373
    %v375 = vpop.f32.mrf.mxu0
    %376 = vmatprep.mubr.f32.mxu0 0.0
    %377 = vmatmul.mubr.f32.gmra.mxu0 %v169
    %v378 = vpop.f32.mrf.mxu0
    %v379 = vadd.f32 0.0, %v378
    %v380 = vpop.f32.mrf.mxu0
    %381 = vmatprep.mubr.f32.mxu0 0.0
    %382 = vmatmul.mubr.f32.gmra.mxu0 %v172
    %v383 = vpop.f32.mrf.mxu0
    %v384 = vadd.f32 0.0, %v383
    %v385 = vpop.f32.mrf.mxu0
    %386 = vmatprep.mubr.f32.mxu0 0.0
    %387 = vmatmul.mubr.f32.gmra.mxu0 %v175
    %v388 = vpop.f32.mrf.mxu0
    %v389 = vadd.f32 0.0, %v388
    %v390 = vpop.f32.mrf.mxu0
    %391 = vmatprep.mubr.f32.mxu0 0.0
    %392 = vmatmul.mubr.f32.gmra.mxu0 %v178
    %v393 = vpop.f32.mrf.mxu0
    %v394 = vadd.f32 0.0, %v393
    %v395 = vpop.f32.mrf.mxu0
    %396 = vmatprep.mubr.f32.mxu0 0.0
    %397 = vmatmul.mubr.f32.gmra.mxu0 %v181
    %v398 = vpop.f32.mrf.mxu0
    %v399 = vadd.f32 0.0, %v398
    %v400 = vpop.f32.mrf.mxu0
    %401 = vmatprep.mubr.f32.mxu0 0.0
    %402 = vmatmul.mubr.f32.gmra.mxu0 %v184
    %v403 = vpop.f32.mrf.mxu0
    %v404 = vadd.f32 0.0, %v403
    %v405 = vpop.f32.mrf.mxu0
    %406 = vmatprep.mubr.f32.mxu0 0.0
    %407 = vmatmul.mubr.f32.gmra.mxu0 %v187
    %v408 = vpop.f32.mrf.mxu0
    %v409 = vadd.f32 0.0, %v408
    %v410 = vpop.f32.mrf.mxu0
    %411 = vmatprep.mubr.f32.mxu0 0.0
    %412 = vmatmul.mubr.f32.gmra.mxu0 %v190
    %v413 = vpop.f32.mrf.mxu0
    %v414 = vadd.f32 0.0, %v413
    %v415 = vpop.f32.mrf.mxu0
    %416 = vmatprep.mubr.f32.mxu0 0.0
    %417 = vmatmul.mubr.f32.gmra.mxu0 %v193
    %v418 = vpop.f32.mrf.mxu0
    %v419 = vadd.f32 0.0, %v418
    %v420 = vpop.f32.mrf.mxu0
    %421 = vmatprep.mubr.f32.mxu0 0.0
    %422 = vmatmul.mubr.f32.gmra.mxu0 %v196
    %v423 = vpop.f32.mrf.mxu0
    %v424 = vadd.f32 0.0, %v423
    %v425 = vpop.f32.mrf.mxu0
    %426 = vdwg.mxu0
    %vm427 = vcmask 97280
    %v429 = vsel %vm427, %v34, 0
    %v432 = vsel %vm427, %v35, 0
    %v435 = vsel %vm427, %v36, 0
    %v438 = vsel %vm427, %v37, 0
    %v441 = vsel %vm427, %v38, 0
    %v444 = vsel %vm427, %v39, 0
    %v447 = vsel %vm427, %v40, 0
    %v450 = vsel %vm427, %v41, 0
    %v453 = vsel %vm427, %v42, 0
    %v456 = vsel %vm427, %v43, 0
    %v459 = vsel %vm427, %v44, 0
    %v462 = vsel %vm427, %v45, 0
    %v465 = vsel %vm427, %v46, 0
    %v468 = vsel %vm427, %v47, 0
    %v471 = vsel %vm427, %v48, 0
    %v474 = vsel %vm427, %v49, 0
    %v477 = vsel %vm427, %v50, 0
    %v480 = vsel %vm427, %v51, 0
    %v483 = vsel %vm427, %v52, 0
    %v486 = vsel %vm427, %v53, 0
    %v489 = vsel %vm427, %v54, 0
    %v492 = vsel %vm427, %v55, 0
    %v495 = vsel %vm427, %v56, 0
    %v498 = vsel %vm427, %v57, 0
    %v501 = vsel %vm427, %v58, 0
    %v504 = vsel %vm427, %v59, 0
    %v507 = vsel %vm427, %v60, 0
    %v510 = vsel %vm427, %v61, 0
    %v513 = vsel %vm427, %v62, 0
    %v516 = vsel %vm427, %v63, 0
    %v519 = vsel %vm427, %v64, 0
    %v522 = vsel %vm427, %v65, 0
    %v525 = vsel %vm198, %v67, 0
    %527 = vmatprep.subr.mxu0 0.0
    %528 = vmatpush1.msra.mxu0 0.0
    %529 = vmatprep.subr.mxu0 0.0
    %530 = vmatpush1.msra.mxu0 0.0
    %531 = vmatprep.subr.mxu0 0.0
    %532 = vmatpush1.msra.mxu0 0.0
    %533 = vmatprep.subr.mxu0 0.0
    %534 = vmatpush1.msra.mxu0 0.0
    %535 = vmatprep.subr.mxu0 0.0
    %536 = vmatpush1.msra.mxu0 0.0
    %537 = vmatprep.subr.mxu0 0.0
    %538 = vmatpush1.msra.mxu0 0.0
    %539 = vmatprep.subr.mxu0 0.0
    %540 = vmatpush1.msra.mxu0 0.0
    %541 = vmatprep.subr.mxu0 0.0
    %542 = vmatpush1.msra.mxu0 0.0
    %543 = vmatprep.subr.mxu0 0.0
    %544 = vmatpush1.msra.mxu0 0.0
    %545 = vmatprep.subr.mxu0 0.0
    %546 = vmatpush1.msra.mxu0 0.0
    %547 = vmatprep.subr.mxu0 0.0
    %548 = vmatpush1.msra.mxu0 0.0
    %549 = vmatprep.subr.mxu0 0.0
    %550 = vmatpush1.msra.mxu0 0.0
    %551 = vmatprep.subr.mxu0 0.0
    %552 = vmatpush1.msra.mxu0 0.0
    %553 = vmatprep.subr.mxu0 0.0
    %554 = vmatpush1.msra.mxu0 0.0
    %555 = vmatprep.subr.mxu0 0.0
    %556 = vmatpush1.msra.mxu0 %v525
    %557 = vmatprep.subr.mxu0 0.0
    %558 = vmatpush1.msra.mxu0 %v66
    %559 = vmatprep.subr.mxu0 0.0
    %560 = vmatpush2.msra.mxu0 0.0
    %561 = vmatprep.subr.mxu0 0.0
    %562 = vmatpush2.msra.mxu0 0.0
    %563 = vmatprep.subr.mxu0 0.0
    %564 = vmatpush2.msra.mxu0 0.0
    %565 = vmatprep.subr.mxu0 0.0
    %566 = vmatpush2.msra.mxu0 0.0
    %567 = vmatprep.subr.mxu0 0.0
    %568 = vmatpush2.msra.mxu0 0.0
    %569 = vmatprep.subr.mxu0 0.0
    %570 = vmatpush2.msra.mxu0 0.0
    %571 = vmatprep.subr.mxu0 0.0
    %572 = vmatpush2.msra.mxu0 0.0
    %573 = vmatprep.subr.mxu0 0.0
    %574 = vmatpush2.msra.mxu0 0.0
    %575 = vmatprep.subr.mxu0 0.0
    %576 = vmatpush2.msra.mxu0 0.0
    %577 = vmatprep.subr.mxu0 0.0
    %578 = vmatpush2.msra.mxu0 0.0
    %579 = vmatprep.subr.mxu0 0.0
    %580 = vmatpush2.msra.mxu0 0.0
    %581 = vmatprep.subr.mxu0 0.0
    %582 = vmatpush2.msra.mxu0 0.0
    %583 = vmatprep.subr.mxu0 0.0
    %584 = vmatpush2.msra.mxu0 0.0
    %585 = vmatprep.subr.mxu0 0.0
    %586 = vmatpush2.msra.mxu0 0.0
    %587 = vmatprep.subr.mxu0 0.0
    %588 = vmatpush2.msra.mxu0 0.0
    %589 = vmatprep.subr.mxu0 0.0
    %590 = vmatpush2.msra.mxu0 0.0
    %591 = vmatprep.mubr.f32.mxu0 0.0
    %592 = vmatmul.mubr.f32.gmra.mxu0 %v429
    %v593 = vpop.f32.mrf.mxu0
    %v594 = vadd.f32 %v269, %v593
    %v595 = vpop.f32.mrf.mxu0
    %596 = vmatprep.mubr.f32.mxu0 0.0
    %597 = vmatmul.mubr.f32.gmra.mxu0 %v432
    %v598 = vpop.f32.mrf.mxu0
    %v599 = vadd.f32 %v274, %v598
    %v600 = vpop.f32.mrf.mxu0
    %601 = vmatprep.mubr.f32.mxu0 0.0
    %602 = vmatmul.mubr.f32.gmra.mxu0 %v435
    %v603 = vpop.f32.mrf.mxu0
    %v604 = vadd.f32 %v279, %v603
    %v605 = vpop.f32.mrf.mxu0
    %606 = vmatprep.mubr.f32.mxu0 0.0
    %607 = vmatmul.mubr.f32.gmra.mxu0 %v438
    %v608 = vpop.f32.mrf.mxu0
    %v609 = vadd.f32 %v284, %v608
    %v610 = vpop.f32.mrf.mxu0
    %611 = vmatprep.mubr.f32.mxu0 0.0
    %612 = vmatmul.mubr.f32.gmra.mxu0 %v441
    %v613 = vpop.f32.mrf.mxu0
    %v614 = vadd.f32 %v289, %v613
    %v615 = vpop.f32.mrf.mxu0
    %616 = vmatprep.mubr.f32.mxu0 0.0
    %617 = vmatmul.mubr.f32.gmra.mxu0 %v444
    %v618 = vpop.f32.mrf.mxu0
    %v619 = vadd.f32 %v294, %v618
    %v620 = vpop.f32.mrf.mxu0
    %621 = vmatprep.mubr.f32.mxu0 0.0
    %622 = vmatmul.mubr.f32.gmra.mxu0 %v447
    %v623 = vpop.f32.mrf.mxu0
    %v624 = vadd.f32 %v299, %v623
    %v625 = vpop.f32.mrf.mxu0
    %626 = vmatprep.mubr.f32.mxu0 0.0
    %627 = vmatmul.mubr.f32.gmra.mxu0 %v450
    %v628 = vpop.f32.mrf.mxu0
    %v629 = vadd.f32 %v304, %v628
    %v630 = vpop.f32.mrf.mxu0
    %631 = vmatprep.mubr.f32.mxu0 0.0
    %632 = vmatmul.mubr.f32.gmra.mxu0 %v453
    %v633 = vpop.f32.mrf.mxu0
    %v634 = vadd.f32 %v309, %v633
    %v635 = vpop.f32.mrf.mxu0
    %636 = vmatprep.mubr.f32.mxu0 0.0
    %637 = vmatmul.mubr.f32.gmra.mxu0 %v456
    %v638 = vpop.f32.mrf.mxu0
    %v639 = vadd.f32 %v314, %v638
    %v640 = vpop.f32.mrf.mxu0
    %641 = vmatprep.mubr.f32.mxu0 0.0
    %642 = vmatmul.mubr.f32.gmra.mxu0 %v459
    %v643 = vpop.f32.mrf.mxu0
    %v644 = vadd.f32 %v319, %v643
    %v645 = vpop.f32.mrf.mxu0
    %646 = vmatprep.mubr.f32.mxu0 0.0
    %647 = vmatmul.mubr.f32.gmra.mxu0 %v462
    %v648 = vpop.f32.mrf.mxu0
    %v649 = vadd.f32 %v324, %v648
    %v650 = vpop.f32.mrf.mxu0
    %651 = vmatprep.mubr.f32.mxu0 0.0
    %652 = vmatmul.mubr.f32.gmra.mxu0 %v465
    %v653 = vpop.f32.mrf.mxu0
    %v654 = vadd.f32 %v329, %v653
    %v655 = vpop.f32.mrf.mxu0
    %656 = vmatprep.mubr.f32.mxu0 0.0
    %657 = vmatmul.mubr.f32.gmra.mxu0 %v468
    %v658 = vpop.f32.mrf.mxu0
    %v659 = vadd.f32 %v334, %v658
    %v660 = vpop.f32.mrf.mxu0
    %661 = vmatprep.mubr.f32.mxu0 0.0
    %662 = vmatmul.mubr.f32.gmra.mxu0 %v471
    %v663 = vpop.f32.mrf.mxu0
    %v664 = vadd.f32 %v339, %v663
    %v665 = vpop.f32.mrf.mxu0
    %666 = vmatprep.mubr.f32.mxu0 0.0
    %667 = vmatmul.mubr.f32.gmra.mxu0 %v474
    %v668 = vpop.f32.mrf.mxu0
    %v669 = vadd.f32 %v344, %v668
    %v670 = vpop.f32.mrf.mxu0
    %671 = vmatprep.mubr.f32.mxu0 0.0
    %672 = vmatmul.mubr.f32.gmra.mxu0 %v477
    %v673 = vpop.f32.mrf.mxu0
    %v674 = vadd.f32 %v349, %v673
    %v675 = vpop.f32.mrf.mxu0
    %676 = vmatprep.mubr.f32.mxu0 0.0
    %677 = vmatmul.mubr.f32.gmra.mxu0 %v480
    %v678 = vpop.f32.mrf.mxu0
    %v679 = vadd.f32 %v354, %v678
    %v680 = vpop.f32.mrf.mxu0
    %681 = vmatprep.mubr.f32.mxu0 0.0
    %682 = vmatmul.mubr.f32.gmra.mxu0 %v483
    %v683 = vpop.f32.mrf.mxu0
    %v684 = vadd.f32 %v359, %v683
    %v685 = vpop.f32.mrf.mxu0
    %686 = vmatprep.mubr.f32.mxu0 0.0
    %687 = vmatmul.mubr.f32.gmra.mxu0 %v486
    %v688 = vpop.f32.mrf.mxu0
    %v689 = vadd.f32 %v364, %v688
    %v690 = vpop.f32.mrf.mxu0
    %691 = vmatprep.mubr.f32.mxu0 0.0
    %692 = vmatmul.mubr.f32.gmra.mxu0 %v489
    %v693 = vpop.f32.mrf.mxu0
    %v694 = vadd.f32 %v369, %v693
    %v695 = vpop.f32.mrf.mxu0
    %696 = vmatprep.mubr.f32.mxu0 0.0
    %697 = vmatmul.mubr.f32.gmra.mxu0 %v492
    %v698 = vpop.f32.mrf.mxu0
    %v699 = vadd.f32 %v374, %v698
    %v700 = vpop.f32.mrf.mxu0
    %701 = vmatprep.mubr.f32.mxu0 0.0
    %702 = vmatmul.mubr.f32.gmra.mxu0 %v495
    %v703 = vpop.f32.mrf.mxu0
    %v704 = vadd.f32 %v379, %v703
    %v705 = vpop.f32.mrf.mxu0
    %706 = vmatprep.mubr.f32.mxu0 0.0
    %707 = vmatmul.mubr.f32.gmra.mxu0 %v498
    %v708 = vpop.f32.mrf.mxu0
    %v709 = vadd.f32 %v384, %v708
    %v710 = vpop.f32.mrf.mxu0
    %711 = vmatprep.mubr.f32.mxu0 0.0
    %712 = vmatmul.mubr.f32.gmra.mxu0 %v501
    %v713 = vpop.f32.mrf.mxu0
    %v714 = vadd.f32 %v389, %v713
    %v715 = vpop.f32.mrf.mxu0
    %716 = vmatprep.mubr.f32.mxu0 0.0
    %717 = vmatmul.mubr.f32.gmra.mxu0 %v504
    %v718 = vpop.f32.mrf.mxu0
    %v719 = vadd.f32 %v394, %v718
    %v720 = vpop.f32.mrf.mxu0
    %721 = vmatprep.mubr.f32.mxu0 0.0
    %722 = vmatmul.mubr.f32.gmra.mxu0 %v507
    %v723 = vpop.f32.mrf.mxu0
    %v724 = vadd.f32 %v399, %v723
    %v725 = vpop.f32.mrf.mxu0
    %726 = vmatprep.mubr.f32.mxu0 0.0
    %727 = vmatmul.mubr.f32.gmra.mxu0 %v510
    %v728 = vpop.f32.mrf.mxu0
    %v729 = vadd.f32 %v404, %v728
    %v730 = vpop.f32.mrf.mxu0
    %731 = vmatprep.mubr.f32.mxu0 0.0
    %732 = vmatmul.mubr.f32.gmra.mxu0 %v513
    %v733 = vpop.f32.mrf.mxu0
    %v734 = vadd.f32 %v409, %v733
    %v735 = vpop.f32.mrf.mxu0
    %736 = vmatprep.mubr.f32.mxu0 0.0
    %737 = vmatmul.mubr.f32.gmra.mxu0 %v516
    %v738 = vpop.f32.mrf.mxu0
    %v739 = vadd.f32 %v414, %v738
    %v740 = vpop.f32.mrf.mxu0
    %741 = vmatprep.mubr.f32.mxu0 0.0
    %742 = vmatmul.mubr.f32.gmra.mxu0 %v519
    %v743 = vpop.f32.mrf.mxu0
    %v744 = vadd.f32 %v419, %v743
    %v745 = vpop.f32.mrf.mxu0
    %746 = vmatprep.mubr.f32.mxu0 0.0
    %747 = vmatmul.mubr.f32.gmra.mxu0 %v522
    %v748 = vpop.f32.mrf.mxu0
    %v749 = vadd.f32 %v424, %v748
    %v750 = vpop.f32.mrf.mxu0
    %751 = vdwg.mxu0
    %v752 = vld [vmem:[%s4] sm:$0xff]
    %v753 = vld [vmem:[%s4 + $0x8] sm:$0xff]
    %v754 = vld [vmem:[%s4 + $0x10] sm:$0xff]
    %v755 = vld [vmem:[%s4 + $0x18] sm:$0xff]
    %v756 = vld [vmem:[%s4 + $0x20] sm:$0xff]
    %v757 = vld [vmem:[%s4 + $0x28] sm:$0xff]
    %v758 = vld [vmem:[%s4 + $0x30] sm:$0xff]
    %v759 = vld [vmem:[%s4 + $0x38] sm:$0xff]
    %v760 = vld [vmem:[%s4 + $0x40] sm:$0xff]
    %v761 = vld [vmem:[%s4 + $0x48] sm:$0xff]
    %v762 = vld [vmem:[%s4 + $0x50] sm:$0xff]
    %v763 = vld [vmem:[%s4 + $0x58] sm:$0xff]
    %v764 = vld [vmem:[%s4 + $0x60] sm:$0xff]
    %v765 = vld [vmem:[%s4 + $0x68] sm:$0xff]
    %v766 = vld [vmem:[%s4 + $0x70] sm:$0xff]
    %v767 = vld [vmem:[%s4 + $0x78] sm:$0xff]
    %v768 = vld [vmem:[%s4 + $0x80] sm:$0xff]
    %v769 = vld [vmem:[%s4 + $0x88] sm:$0xff]
    %v770 = vld [vmem:[%s4 + $0x90] sm:$0xff]
    %v771 = vld [vmem:[%s4 + $0x98] sm:$0xff]
    %v772 = vld [vmem:[%s4 + $0xa0] sm:$0xff]
    %v773 = vld [vmem:[%s4 + $0xa8] sm:$0xff]
    %v774 = vld [vmem:[%s4 + $0xb0] sm:$0xff]
    %v775 = vld [vmem:[%s4 + $0xb8] sm:$0xff]
    %v776 = vld [vmem:[%s4 + $0xc0] sm:$0xff]
    %v777 = vld [vmem:[%s4 + $0xc8] sm:$0xff]
    %v778 = vld [vmem:[%s4 + $0xd0] sm:$0xff]
    %v779 = vld [vmem:[%s4 + $0xd8] sm:$0xff]
    %v780 = vld [vmem:[%s4 + $0xe0] sm:$0xff]
    %v781 = vld [vmem:[%s4 + $0xe8] sm:$0xff]
    %v782 = vld [vmem:[%s4 + $0xf0] sm:$0xff]
    %v783 = vld [vmem:[%s4 + $0xf8] sm:$0xff]
    %785 = vset.pattern.permute.xlu0 0
    %786 = vperm.xlu0 %785, %v752
    %v787 = vpop.permute.xlu0 %786
    %790 = vset.pattern.permute.xlu0 0
    %791 = vperm.xlu0 %790, %v753
    %v792 = vpop.permute.xlu0 %791
    %795 = vset.pattern.permute.xlu0 0
    %796 = vperm.xlu0 %795, %v754
    %v797 = vpop.permute.xlu0 %796
    %800 = vset.pattern.permute.xlu0 0
    %801 = vperm.xlu0 %800, %v755
    %v802 = vpop.permute.xlu0 %801
    %805 = vset.pattern.permute.xlu0 0
    %806 = vperm.xlu0 %805, %v756
    %v807 = vpop.permute.xlu0 %806
    %810 = vset.pattern.permute.xlu0 0
    %811 = vperm.xlu0 %810, %v757
    %v812 = vpop.permute.xlu0 %811
    %815 = vset.pattern.permute.xlu0 0
    %816 = vperm.xlu0 %815, %v758
    %v817 = vpop.permute.xlu0 %816
    %820 = vset.pattern.permute.xlu0 0
    %821 = vperm.xlu0 %820, %v759
    %v822 = vpop.permute.xlu0 %821
    %825 = vset.pattern.permute.xlu0 0
    %826 = vperm.xlu0 %825, %v760
    %v827 = vpop.permute.xlu0 %826
    %830 = vset.pattern.permute.xlu0 0
    %831 = vperm.xlu0 %830, %v761
    %v832 = vpop.permute.xlu0 %831
    %835 = vset.pattern.permute.xlu0 0
    %836 = vperm.xlu0 %835, %v762
    %v837 = vpop.permute.xlu0 %836
    %840 = vset.pattern.permute.xlu0 0
    %841 = vperm.xlu0 %840, %v763
    %v842 = vpop.permute.xlu0 %841
    %845 = vset.pattern.permute.xlu0 0
    %846 = vperm.xlu0 %845, %v764
    %v847 = vpop.permute.xlu0 %846
    %850 = vset.pattern.permute.xlu0 0
    %851 = vperm.xlu0 %850, %v765
    %v852 = vpop.permute.xlu0 %851
    %855 = vset.pattern.permute.xlu0 0
    %856 = vperm.xlu0 %855, %v766
    %v857 = vpop.permute.xlu0 %856
    %860 = vset.pattern.permute.xlu0 0
    %861 = vperm.xlu0 %860, %v767
    %v862 = vpop.permute.xlu0 %861
    %865 = vset.pattern.permute.xlu0 0
    %866 = vperm.xlu0 %865, %v768
    %v867 = vpop.permute.xlu0 %866
    %870 = vset.pattern.permute.xlu0 0
    %871 = vperm.xlu0 %870, %v769
    %v872 = vpop.permute.xlu0 %871
    %875 = vset.pattern.permute.xlu0 0
    %876 = vperm.xlu0 %875, %v770
    %v877 = vpop.permute.xlu0 %876
    %880 = vset.pattern.permute.xlu0 0
    %881 = vperm.xlu0 %880, %v771
    %v882 = vpop.permute.xlu0 %881
    %885 = vset.pattern.permute.xlu0 0
    %886 = vperm.xlu0 %885, %v772
    %v887 = vpop.permute.xlu0 %886
    %890 = vset.pattern.permute.xlu0 0
    %891 = vperm.xlu0 %890, %v773
    %v892 = vpop.permute.xlu0 %891
    %895 = vset.pattern.permute.xlu0 0
    %896 = vperm.xlu0 %895, %v774
    %v897 = vpop.permute.xlu0 %896
    %900 = vset.pattern.permute.xlu0 0
    %901 = vperm.xlu0 %900, %v775
    %v902 = vpop.permute.xlu0 %901
    %905 = vset.pattern.permute.xlu0 0
    %906 = vperm.xlu0 %905, %v776
    %v907 = vpop.permute.xlu0 %906
    %910 = vset.pattern.permute.xlu0 0
    %911 = vperm.xlu0 %910, %v777
    %v912 = vpop.permute.xlu0 %911
    %915 = vset.pattern.permute.xlu0 0
    %916 = vperm.xlu0 %915, %v778
    %v917 = vpop.permute.xlu0 %916
    %920 = vset.pattern.permute.xlu0 0
    %921 = vperm.xlu0 %920, %v779
    %v922 = vpop.permute.xlu0 %921
    %925 = vset.pattern.permute.xlu0 0
    %926 = vperm.xlu0 %925, %v780
    %v927 = vpop.permute.xlu0 %926
    %930 = vset.pattern.permute.xlu0 0
    %931 = vperm.xlu0 %930, %v781
    %v932 = vpop.permute.xlu0 %931
    %935 = vset.pattern.permute.xlu0 0
    %936 = vperm.xlu0 %935, %v782
    %v937 = vpop.permute.xlu0 %936
    %940 = vset.pattern.permute.xlu0 0
    %941 = vperm.xlu0 %940, %v783
    %v942 = vpop.permute.xlu0 %941
    %v944 = vadd.f32 %v594, %v787
    %v945 = vadd.f32 %v599, %v792
    %v946 = vadd.f32 %v604, %v797
    %v947 = vadd.f32 %v609, %v802
    %v948 = vadd.f32 %v614, %v807
    %v949 = vadd.f32 %v619, %v812
    %v950 = vadd.f32 %v624, %v817
    %v951 = vadd.f32 %v629, %v822
    %v952 = vadd.f32 %v634, %v827
    %v953 = vadd.f32 %v639, %v832
    %v954 = vadd.f32 %v644, %v837
    %v955 = vadd.f32 %v649, %v842
    %v956 = vadd.f32 %v654, %v847
    %v957 = vadd.f32 %v659, %v852
    %v958 = vadd.f32 %v664, %v857
    %v959 = vadd.f32 %v669, %v862
    %v960 = vadd.f32 %v674, %v867
    %v961 = vadd.f32 %v679, %v872
    %v962 = vadd.f32 %v684, %v877
    %v963 = vadd.f32 %v689, %v882
    %v964 = vadd.f32 %v694, %v887
    %v965 = vadd.f32 %v699, %v892
    %v966 = vadd.f32 %v704, %v897
    %v967 = vadd.f32 %v709, %v902
    %v968 = vadd.f32 %v714, %v907
    %v969 = vadd.f32 %v719, %v912
    %v970 = vadd.f32 %v724, %v917
    %v971 = vadd.f32 %v729, %v922
    %v972 = vadd.f32 %v734, %v927
    %v973 = vadd.f32 %v739, %v932
    %v974 = vadd.f32 %v744, %v937
    %v975 = vadd.f32 %v749, %v942
    %v976 = vmax.f32 %v944, 0.0
    %v977 = vmax.f32 %v945, 0.0
    %v978 = vmax.f32 %v946, 0.0
    %v979 = vmax.f32 %v947, 0.0
    %v980 = vmax.f32 %v948, 0.0
    %v981 = vmax.f32 %v949, 0.0
    %v982 = vmax.f32 %v950, 0.0
    %v983 = vmax.f32 %v951, 0.0
    %v984 = vmax.f32 %v952, 0.0
    %v985 = vmax.f32 %v953, 0.0
    %v986 = vmax.f32 %v954, 0.0
    %v987 = vmax.f32 %v955, 0.0
    %v988 = vmax.f32 %v956, 0.0
    %v989 = vmax.f32 %v957, 0.0
    %v990 = vmax.f32 %v958, 0.0
    %v991 = vmax.f32 %v959, 0.0
    %v992 = vmax.f32 %v960, 0.0
    %v993 = vmax.f32 %v961, 0.0
    %v994 = vmax.f32 %v962, 0.0
    %v995 = vmax.f32 %v963, 0.0
    %v996 = vmax.f32 %v964, 0.0
    %v997 = vmax.f32 %v965, 0.0
    %v998 = vmax.f32 %v966, 0.0
    %v999 = vmax.f32 %v967, 0.0
    %v1000 = vmax.f32 %v968, 0.0
    %v1001 = vmax.f32 %v969, 0.0
    %v1002 = vmax.f32 %v970, 0.0
    %v1003 = vmax.f32 %v971, 0.0
    %v1004 = vmax.f32 %v972, 0.0
    %v1005 = vmax.f32 %v973, 0.0
    %v1006 = vmax.f32 %v974, 0.0
    %v1007 = vmax.f32 %v975, 0.0
    %v1008 = vld [vmem:[%s5] sm:$0xff]
    %v1009 = vld [vmem:[%s5 + $0x8] sm:$0xff]
    %v1010 = vld [vmem:[%s5 + $0x10] sm:$0xff]
    %v1011 = vld [vmem:[%s5 + $0x18] sm:$0xff]
    %v1012 = vld [vmem:[%s5 + $0x20] sm:$0xff]
    %v1013 = vld [vmem:[%s5 + $0x28] sm:$0xff]
    %v1014 = vld [vmem:[%s5 + $0x30] sm:$0xff]
    %v1015 = vld [vmem:[%s5 + $0x38] sm:$0xff]
    %v1016 = vld [vmem:[%s5 + $0x40] sm:$0xff]
    %v1017 = vld [vmem:[%s5 + $0x48] sm:$0xff]
    %v1018 = vld [vmem:[%s5 + $0x50] sm:$0xff]
    %v1019 = vld [vmem:[%s5 + $0x58] sm:$0xff]
    %v1020 = vld [vmem:[%s5 + $0x60] sm:$0xff]
    %v1021 = vld [vmem:[%s5 + $0x68] sm:$0xff]
    %v1022 = vld [vmem:[%s5 + $0x70] sm:$0xff]
    %v1023 = vld [vmem:[%s5 + $0x78] sm:$0xff]
    %v1024 = vld [vmem:[%s5 + $0x80] sm:$0xff]
    %v1025 = vld [vmem:[%s5 + $0x88] sm:$0xff]
    %v1026 = vld [vmem:[%s5 + $0x90] sm:$0xff]
    %v1027 = vld [vmem:[%s5 + $0x98] sm:$0xff]
    %v1028 = vld [vmem:[%s5 + $0xa0] sm:$0xff]
    %v1029 = vld [vmem:[%s5 + $0xa8] sm:$0xff]
    %v1030 = vld [vmem:[%s5 + $0xb0] sm:$0xff]
    %v1031 = vld [vmem:[%s5 + $0xb8] sm:$0xff]
    %v1032 = vld [vmem:[%s5 + $0xc0] sm:$0xff]
    %v1033 = vld [vmem:[%s5 + $0xc8] sm:$0xff]
    %v1034 = vld [vmem:[%s5 + $0xd0] sm:$0xff]
    %v1035 = vld [vmem:[%s5 + $0xd8] sm:$0xff]
    %v1036 = vld [vmem:[%s5 + $0xe0] sm:$0xff]
    %v1037 = vld [vmem:[%s5 + $0xe8] sm:$0xff]
    %v1038 = vld [vmem:[%s5 + $0xf0] sm:$0xff]
    %v1039 = vld [vmem:[%s5 + $0xf8] sm:$0xff]
    %v1040 = vld [vmem:[%s5 + $0x100] sm:$0xff]
    %v1041 = vld [vmem:[%s5 + $0x108] sm:$0xff]
    %v1042 = vld [vmem:[%s5 + $0x110] sm:$0xff]
    %v1043 = vld [vmem:[%s5 + $0x118] sm:$0xff]
    %v1044 = vld [vmem:[%s5 + $0x120] sm:$0xff]
    %v1045 = vld [vmem:[%s5 + $0x128] sm:$0xff]
    %v1046 = vld [vmem:[%s5 + $0x130] sm:$0xff]
    %v1047 = vld [vmem:[%s5 + $0x138] sm:$0xff]
    %v1048 = vld [vmem:[%s5 + $0x140] sm:$0xff]
    %v1049 = vld [vmem:[%s5 + $0x148] sm:$0xff]
    %v1050 = vld [vmem:[%s5 + $0x150] sm:$0xff]
    %v1051 = vld [vmem:[%s5 + $0x158] sm:$0xff]
    %v1052 = vld [vmem:[%s5 + $0x160] sm:$0xff]
    %v1053 = vld [vmem:[%s5 + $0x168] sm:$0xff]
    %v1054 = vld [vmem:[%s5 + $0x170] sm:$0xff]
    %v1055 = vld [vmem:[%s5 + $0x178] sm:$0xff]
    %v1056 = vld [vmem:[%s5 + $0x180] sm:$0xff]
    %v1057 = vld [vmem:[%s5 + $0x188] sm:$0xff]
    %v1058 = vld [vmem:[%s5 + $0x190] sm:$0xff]
    %v1059 = vld [vmem:[%s5 + $0x198] sm:$0xff]
    %v1060 = vld [vmem:[%s5 + $0x1a0] sm:$0xff]
    %v1061 = vld [vmem:[%s5 + $0x1a8] sm:$0xff]
    %v1062 = vld [vmem:[%s5 + $0x1b0] sm:$0xff]
    %v1063 = vld [vmem:[%s5 + $0x1b8] sm:$0xff]
    %v1064 = vld [vmem:[%s5 + $0x1c0] sm:$0xff]
    %v1065 = vld [vmem:[%s5 + $0x1c8] sm:$0xff]
    %v1066 = vld [vmem:[%s5 + $0x1d0] sm:$0xff]
    %v1067 = vld [vmem:[%s5 + $0x1d8] sm:$0xff]
    %v1068 = vld [vmem:[%s5 + $0x1e0] sm:$0xff]
    %v1069 = vld [vmem:[%s5 + $0x1e8] sm:$0xff]
    %v1070 = vld [vmem:[%s5 + $0x1f0] sm:$0xff]
    %v1071 = vld [vmem:[%s5 + $0x1f8] sm:$0xff]
    %v1072 = vld [vmem:[%s6] sm:$0xff]
    %v1073 = vld [vmem:[%s6 + $0x8] sm:$0xff]
    %v1074 = vld [vmem:[%s6 + $0x10] sm:$0xff]
    %v1075 = vld [vmem:[%s6 + $0x18] sm:$0xff]
    %v1076 = vld [vmem:[%s6 + $0x20] sm:$0xff]
    %v1077 = vld [vmem:[%s6 + $0x28] sm:$0xff]
    %v1078 = vld [vmem:[%s6 + $0x30] sm:$0xff]
    %v1079 = vld [vmem:[%s6 + $0x38] sm:$0xff]
    %v1080 = vld [vmem:[%s6 + $0x40] sm:$0xff]
    %v1081 = vld [vmem:[%s6 + $0x48] sm:$0xff]
    %v1082 = vld [vmem:[%s6 + $0x50] sm:$0xff]
    %v1083 = vld [vmem:[%s6 + $0x58] sm:$0xff]
    %v1084 = vld [vmem:[%s6 + $0x60] sm:$0xff]
    %v1085 = vld [vmem:[%s6 + $0x68] sm:$0xff]
    %v1086 = vld [vmem:[%s6 + $0x70] sm:$0xff]
    %v1087 = vld [vmem:[%s6 + $0x78] sm:$0xff]
    %v1088 = vld [vmem:[%s6 + $0x80] sm:$0xff]
    %v1089 = vld [vmem:[%s6 + $0x88] sm:$0xff]
    %v1090 = vld [vmem:[%s6 + $0x90] sm:$0xff]
    %v1091 = vld [vmem:[%s6 + $0x98] sm:$0xff]
    %v1092 = vld [vmem:[%s6 + $0xa0] sm:$0xff]
    %v1093 = vld [vmem:[%s6 + $0xa8] sm:$0xff]
    %v1094 = vld [vmem:[%s6 + $0xb0] sm:$0xff]
    %v1095 = vld [vmem:[%s6 + $0xb8] sm:$0xff]
    %v1096 = vld [vmem:[%s6 + $0xc0] sm:$0xff]
    %v1097 = vld [vmem:[%s6 + $0xc8] sm:$0xff]
    %v1098 = vld [vmem:[%s6 + $0xd0] sm:$0xff]
    %v1099 = vld [vmem:[%s6 + $0xd8] sm:$0xff]
    %v1100 = vld [vmem:[%s6 + $0xe0] sm:$0xff]
    %v1101 = vld [vmem:[%s6 + $0xe8] sm:$0xff]
    %v1102 = vld [vmem:[%s6 + $0xf0] sm:$0xff]
    %v1103 = vld [vmem:[%s6 + $0xf8] sm:$0xff]
    %1105 = vset.pattern.permute.xlu0 0
    %1106 = vperm.xlu0 %1105, %v1072
    %v1107 = vpop.permute.xlu0 %1106
    %1110 = vset.pattern.permute.xlu0 0
    %1111 = vperm.xlu0 %1110, %v1073
    %v1112 = vpop.permute.xlu0 %1111
    %1115 = vset.pattern.permute.xlu0 0
    %1116 = vperm.xlu0 %1115, %v1074
    %v1117 = vpop.permute.xlu0 %1116
    %1120 = vset.pattern.permute.xlu0 0
    %1121 = vperm.xlu0 %1120, %v1075
    %v1122 = vpop.permute.xlu0 %1121
    %1125 = vset.pattern.permute.xlu0 0
    %1126 = vperm.xlu0 %1125, %v1076
    %v1127 = vpop.permute.xlu0 %1126
    %1130 = vset.pattern.permute.xlu0 0
    %1131 = vperm.xlu0 %1130, %v1077
    %v1132 = vpop.permute.xlu0 %1131
    %1135 = vset.pattern.permute.xlu0 0
    %1136 = vperm.xlu0 %1135, %v1078
    %v1137 = vpop.permute.xlu0 %1136
    %1140 = vset.pattern.permute.xlu0 0
    %1141 = vperm.xlu0 %1140, %v1079
    %v1142 = vpop.permute.xlu0 %1141
    %1145 = vset.pattern.permute.xlu0 0
    %1146 = vperm.xlu0 %1145, %v1080
    %v1147 = vpop.permute.xlu0 %1146
    %1150 = vset.pattern.permute.xlu0 0
    %1151 = vperm.xlu0 %1150, %v1081
    %v1152 = vpop.permute.xlu0 %1151
    %1155 = vset.pattern.permute.xlu0 0
    %1156 = vperm.xlu0 %1155, %v1082
    %v1157 = vpop.permute.xlu0 %1156
    %1160 = vset.pattern.permute.xlu0 0
    %1161 = vperm.xlu0 %1160, %v1083
    %v1162 = vpop.permute.xlu0 %1161
    %1165 = vset.pattern.permute.xlu0 0
    %1166 = vperm.xlu0 %1165, %v1084
    %v1167 = vpop.permute.xlu0 %1166
    %1170 = vset.pattern.permute.xlu0 0
    %1171 = vperm.xlu0 %1170, %v1085
    %v1172 = vpop.permute.xlu0 %1171
    %1175 = vset.pattern.permute.xlu0 0
    %1176 = vperm.xlu0 %1175, %v1086
    %v1177 = vpop.permute.xlu0 %1176
    %1180 = vset.pattern.permute.xlu0 0
    %1181 = vperm.xlu0 %1180, %v1087
    %v1182 = vpop.permute.xlu0 %1181
    %1185 = vset.pattern.permute.xlu0 0
    %1186 = vperm.xlu0 %1185, %v1088
    %v1187 = vpop.permute.xlu0 %1186
    %1190 = vset.pattern.permute.xlu0 0
    %1191 = vperm.xlu0 %1190, %v1089
    %v1192 = vpop.permute.xlu0 %1191
    %1195 = vset.pattern.permute.xlu0 0
    %1196 = vperm.xlu0 %1195, %v1090
    %v1197 = vpop.permute.xlu0 %1196
    %1200 = vset.pattern.permute.xlu0 0
    %1201 = vperm.xlu0 %1200, %v1091
    %v1202 = vpop.permute.xlu0 %1201
    %1205 = vset.pattern.permute.xlu0 0
    %1206 = vperm.xlu0 %1205, %v1092
    %v1207 = vpop.permute.xlu0 %1206
    %1210 = vset.pattern.permute.xlu0 0
    %1211 = vperm.xlu0 %1210, %v1093
    %v1212 = vpop.permute.xlu0 %1211
    %1215 = vset.pattern.permute.xlu0 0
    %1216 = vperm.xlu0 %1215, %v1094
    %v1217 = vpop.permute.xlu0 %1216
    %1220 = vset.pattern.permute.xlu0 0
    %1221 = vperm.xlu0 %1220, %v1095
    %v1222 = vpop.permute.xlu0 %1221
    %1225 = vset.pattern.permute.xlu0 0
    %1226 = vperm.xlu0 %1225, %v1096
    %v1227 = vpop.permute.xlu0 %1226
    %1230 = vset.pattern.permute.xlu0 0
    %1231 = vperm.xlu0 %1230, %v1097
    %v1232 = vpop.permute.xlu0 %1231
    %1235 = vset.pattern.permute.xlu0 0
    %1236 = vperm.xlu0 %1235, %v1098
    %v1237 = vpop.permute.xlu0 %1236
    %1240 = vset.pattern.permute.xlu0 0
    %1241 = vperm.xlu0 %1240, %v1099
    %v1242 = vpop.permute.xlu0 %1241
    %1245 = vset.pattern.permute.xlu0 0
    %1246 = vperm.xlu0 %1245, %v1100
    %v1247 = vpop.permute.xlu0 %1246
    %1250 = vset.pattern.permute.xlu0 0
    %1251 = vperm.xlu0 %1250, %v1101
    %v1252 = vpop.permute.xlu0 %1251
    %1255 = vset.pattern.permute.xlu0 0
    %1256 = vperm.xlu0 %1255, %v1102
    %v1257 = vpop.permute.xlu0 %1256
    %1260 = vset.pattern.permute.xlu0 0
    %1261 = vperm.xlu0 %1260, %v1103
    %v1262 = vpop.permute.xlu0 %1261
    %1264 = vmatprep.subr.mxu0 0.0
    %1265 = vmatpush1.msra.mxu0 %v991
    %1266 = vmatprep.subr.mxu0 0.0
    %1267 = vmatpush1.msra.mxu0 %v990
    %1268 = vmatprep.subr.mxu0 0.0
    %1269 = vmatpush1.msra.mxu0 %v989
    %1270 = vmatprep.subr.mxu0 0.0
    %1271 = vmatpush1.msra.mxu0 %v988
    %1272 = vmatprep.subr.mxu0 0.0
    %1273 = vmatpush1.msra.mxu0 %v987
    %1274 = vmatprep.subr.mxu0 0.0
    %1275 = vmatpush1.msra.mxu0 %v986
    %1276 = vmatprep.subr.mxu0 0.0
    %1277 = vmatpush1.msra.mxu0 %v985
    %1278 = vmatprep.subr.mxu0 0.0
    %1279 = vmatpush1.msra.mxu0 %v984
    %1280 = vmatprep.subr.mxu0 0.0
    %1281 = vmatpush1.msra.mxu0 %v983
    %1282 = vmatprep.subr.mxu0 0.0
    %1283 = vmatpush1.msra.mxu0 %v982
    %1284 = vmatprep.subr.mxu0 0.0
    %1285 = vmatpush1.msra.mxu0 %v981
    %1286 = vmatprep.subr.mxu0 0.0
    %1287 = vmatpush1.msra.mxu0 %v980
    %1288 = vmatprep.subr.mxu0 0.0
    %1289 = vmatpush1.msra.mxu0 %v979
    %1290 = vmatprep.subr.mxu0 0.0
    %1291 = vmatpush1.msra.mxu0 %v978
    %1292 = vmatprep.subr.mxu0 0.0
    %1293 = vmatpush1.msra.mxu0 %v977
    %1294 = vmatprep.subr.mxu0 0.0
    %1295 = vmatpush1.msra.mxu0 %v976
    %1296 = vmatprep.subr.mxu0 0.0
    %1297 = vmatpush2.msra.mxu0 %v1007
    %1298 = vmatprep.subr.mxu0 0.0
    %1299 = vmatpush2.msra.mxu0 %v1006
    %1300 = vmatprep.subr.mxu0 0.0
    %1301 = vmatpush2.msra.mxu0 %v1005
    %1302 = vmatprep.subr.mxu0 0.0
    %1303 = vmatpush2.msra.mxu0 %v1004
    %1304 = vmatprep.subr.mxu0 0.0
    %1305 = vmatpush2.msra.mxu0 %v1003
    %1306 = vmatprep.subr.mxu0 0.0
    %1307 = vmatpush2.msra.mxu0 %v1002
    %1308 = vmatprep.subr.mxu0 0.0
    %1309 = vmatpush2.msra.mxu0 %v1001
    %1310 = vmatprep.subr.mxu0 0.0
    %1311 = vmatpush2.msra.mxu0 %v1000
    %1312 = vmatprep.subr.mxu0 0.0
    %1313 = vmatpush2.msra.mxu0 %v999
    %1314 = vmatprep.subr.mxu0 0.0
    %1315 = vmatpush2.msra.mxu0 %v998
    %1316 = vmatprep.subr.mxu0 0.0
    %1317 = vmatpush2.msra.mxu0 %v997
    %1318 = vmatprep.subr.mxu0 0.0
    %1319 = vmatpush2.msra.mxu0 %v996
    %1320 = vmatprep.subr.mxu0 0.0
    %1321 = vmatpush2.msra.mxu0 %v995
    %1322 = vmatprep.subr.mxu0 0.0
    %1323 = vmatpush2.msra.mxu0 %v994
    %1324 = vmatprep.subr.mxu0 0.0
    %1325 = vmatpush2.msra.mxu0 %v993
    %1326 = vmatprep.subr.mxu0 0.0
    %1327 = vmatpush2.msra.mxu0 %v992
    %1328 = vmatprep.mubr.f32.mxu0 %v1009
    %1329 = vmatmul.mubr.f32.gmra.mxu0 %v1008
    %v1330 = vpop.f32.mrf.mxu0
    %v1331 = vadd.f32 %v1107, %v1330
    %v1332 = vpop.f32.mrf.mxu0
    %1333 = vmatprep.mubr.f32.mxu0 %v1011
    %1334 = vmatmul.mubr.f32.gmra.mxu0 %v1010
    %v1335 = vpop.f32.mrf.mxu0
    %v1336 = vadd.f32 %v1112, %v1335
    %v1337 = vpop.f32.mrf.mxu0
    %1338 = vmatprep.mubr.f32.mxu0 %v1013
    %1339 = vmatmul.mubr.f32.gmra.mxu0 %v1012
    %v1340 = vpop.f32.mrf.mxu0
    %v1341 = vadd.f32 %v1117, %v1340
    %v1342 = vpop.f32.mrf.mxu0
    %1343 = vmatprep.mubr.f32.mxu0 %v1015
    %1344 = vmatmul.mubr.f32.gmra.mxu0 %v1014
    %v1345 = vpop.f32.mrf.mxu0
    %v1346 = vadd.f32 %v1122, %v1345
    %v1347 = vpop.f32.mrf.mxu0
    %1348 = vmatprep.mubr.f32.mxu0 %v1017
    %1349 = vmatmul.mubr.f32.gmra.mxu0 %v1016
    %v1350 = vpop.f32.mrf.mxu0
    %v1351 = vadd.f32 %v1127, %v1350
    %v1352 = vpop.f32.mrf.mxu0
    %1353 = vmatprep.mubr.f32.mxu0 %v1019
    %1354 = vmatmul.mubr.f32.gmra.mxu0 %v1018
    %v1355 = vpop.f32.mrf.mxu0
    %v1356 = vadd.f32 %v1132, %v1355
    %v1357 = vpop.f32.mrf.mxu0
    %1358 = vmatprep.mubr.f32.mxu0 %v1021
    %1359 = vmatmul.mubr.f32.gmra.mxu0 %v1020
    %v1360 = vpop.f32.mrf.mxu0
    %v1361 = vadd.f32 %v1137, %v1360
    %v1362 = vpop.f32.mrf.mxu0
    %1363 = vmatprep.mubr.f32.mxu0 %v1023
    %1364 = vmatmul.mubr.f32.gmra.mxu0 %v1022
    %v1365 = vpop.f32.mrf.mxu0
    %v1366 = vadd.f32 %v1142, %v1365
    %v1367 = vpop.f32.mrf.mxu0
    %1368 = vmatprep.mubr.f32.mxu0 %v1025
    %1369 = vmatmul.mubr.f32.gmra.mxu0 %v1024
    %v1370 = vpop.f32.mrf.mxu0
    %v1371 = vadd.f32 %v1147, %v1370
    %v1372 = vpop.f32.mrf.mxu0
    %1373 = vmatprep.mubr.f32.mxu0 %v1027
    %1374 = vmatmul.mubr.f32.gmra.mxu0 %v1026
    %v1375 = vpop.f32.mrf.mxu0
    %v1376 = vadd.f32 %v1152, %v1375
    %v1377 = vpop.f32.mrf.mxu0
    %1378 = vmatprep.mubr.f32.mxu0 %v1029
    %1379 = vmatmul.mubr.f32.gmra.mxu0 %v1028
    %v1380 = vpop.f32.mrf.mxu0
    %v1381 = vadd.f32 %v1157, %v1380
    %v1382 = vpop.f32.mrf.mxu0
    %1383 = vmatprep.mubr.f32.mxu0 %v1031
    %1384 = vmatmul.mubr.f32.gmra.mxu0 %v1030
    %v1385 = vpop.f32.mrf.mxu0
    %v1386 = vadd.f32 %v1162, %v1385
    %v1387 = vpop.f32.mrf.mxu0
    %1388 = vmatprep.mubr.f32.mxu0 %v1033
    %1389 = vmatmul.mubr.f32.gmra.mxu0 %v1032
    %v1390 = vpop.f32.mrf.mxu0
    %v1391 = vadd.f32 %v1167, %v1390
    %v1392 = vpop.f32.mrf.mxu0
    %1393 = vmatprep.mubr.f32.mxu0 %v1035
    %1394 = vmatmul.mubr.f32.gmra.mxu0 %v1034
    %v1395 = vpop.f32.mrf.mxu0
    %v1396 = vadd.f32 %v1172, %v1395
    %v1397 = vpop.f32.mrf.mxu0
    %1398 = vmatprep.mubr.f32.mxu0 %v1037
    %1399 = vmatmul.mubr.f32.gmra.mxu0 %v1036
    %v1400 = vpop.f32.mrf.mxu0
    %v1401 = vadd.f32 %v1177, %v1400
    %v1402 = vpop.f32.mrf.mxu0
    %1403 = vmatprep.mubr.f32.mxu0 %v1039
    %1404 = vmatmul.mubr.f32.gmra.mxu0 %v1038
    %v1405 = vpop.f32.mrf.mxu0
    %v1406 = vadd.f32 %v1182, %v1405
    %v1407 = vpop.f32.mrf.mxu0
    %1408 = vmatprep.mubr.f32.mxu0 %v1041
    %1409 = vmatmul.mubr.f32.gmra.mxu0 %v1040
    %v1410 = vpop.f32.mrf.mxu0
    %v1411 = vadd.f32 %v1187, %v1410
    %v1412 = vpop.f32.mrf.mxu0
    %1413 = vmatprep.mubr.f32.mxu0 %v1043
    %1414 = vmatmul.mubr.f32.gmra.mxu0 %v1042
    %v1415 = vpop.f32.mrf.mxu0
    %v1416 = vadd.f32 %v1192, %v1415
    %v1417 = vpop.f32.mrf.mxu0
    %1418 = vmatprep.mubr.f32.mxu0 %v1045
    %1419 = vmatmul.mubr.f32.gmra.mxu0 %v1044
    %v1420 = vpop.f32.mrf.mxu0
    %v1421 = vadd.f32 %v1197, %v1420
    %v1422 = vpop.f32.mrf.mxu0
    %1423 = vmatprep.mubr.f32.mxu0 %v1047
    %1424 = vmatmul.mubr.f32.gmra.mxu0 %v1046
    %v1425 = vpop.f32.mrf.mxu0
    %v1426 = vadd.f32 %v1202, %v1425
    %v1427 = vpop.f32.mrf.mxu0
    %1428 = vmatprep.mubr.f32.mxu0 %v1049
    %1429 = vmatmul.mubr.f32.gmra.mxu0 %v1048
    %v1430 = vpop.f32.mrf.mxu0
    %v1431 = vadd.f32 %v1207, %v1430
    %v1432 = vpop.f32.mrf.mxu0
    %1433 = vmatprep.mubr.f32.mxu0 %v1051
    %1434 = vmatmul.mubr.f32.gmra.mxu0 %v1050
    %v1435 = vpop.f32.mrf.mxu0
    %v1436 = vadd.f32 %v1212, %v1435
    %v1437 = vpop.f32.mrf.mxu0
    %1438 = vmatprep.mubr.f32.mxu0 %v1053
    %1439 = vmatmul.mubr.f32.gmra.mxu0 %v1052
    %v1440 = vpop.f32.mrf.mxu0
    %v1441 = vadd.f32 %v1217, %v1440
    %v1442 = vpop.f32.mrf.mxu0
    %1443 = vmatprep.mubr.f32.mxu0 %v1055
    %1444 = vmatmul.mubr.f32.gmra.mxu0 %v1054
    %v1445 = vpop.f32.mrf.mxu0
    %v1446 = vadd.f32 %v1222, %v1445
    %v1447 = vpop.f32.mrf.mxu0
    %1448 = vmatprep.mubr.f32.mxu0 %v1057
    %1449 = vmatmul.mubr.f32.gmra.mxu0 %v1056
    %v1450 = vpop.f32.mrf.mxu0
    %v1451 = vadd.f32 %v1227, %v1450
    %v1452 = vpop.f32.mrf.mxu0
    %1453 = vmatprep.mubr.f32.mxu0 %v1059
    %1454 = vmatmul.mubr.f32.gmra.mxu0 %v1058
    %v1455 = vpop.f32.mrf.mxu0
    %v1456 = vadd.f32 %v1232, %v1455
    %v1457 = vpop.f32.mrf.mxu0
    %1458 = vmatprep.mubr.f32.mxu0 %v1061
    %1459 = vmatmul.mubr.f32.gmra.mxu0 %v1060
    %v1460 = vpop.f32.mrf.mxu0
    %v1461 = vadd.f32 %v1237, %v1460
    %v1462 = vpop.f32.mrf.mxu0
    %1463 = vmatprep.mubr.f32.mxu0 %v1063
    %1464 = vmatmul.mubr.f32.gmra.mxu0 %v1062
    %v1465 = vpop.f32.mrf.mxu0
    %v1466 = vadd.f32 %v1242, %v1465
    %v1467 = vpop.f32.mrf.mxu0
    %1468 = vmatprep.mubr.f32.mxu0 %v1065
    %1469 = vmatmul.mubr.f32.gmra.mxu0 %v1064
    %v1470 = vpop.f32.mrf.mxu0
    %v1471 = vadd.f32 %v1247, %v1470
    %v1472 = vpop.f32.mrf.mxu0
    %1473 = vmatprep.mubr.f32.mxu0 %v1067
    %1474 = vmatmul.mubr.f32.gmra.mxu0 %v1066
    %v1475 = vpop.f32.mrf.mxu0
    %v1476 = vadd.f32 %v1252, %v1475
    %v1477 = vpop.f32.mrf.mxu0
    %1478 = vmatprep.mubr.f32.mxu0 %v1069
    %1479 = vmatmul.mubr.f32.gmra.mxu0 %v1068
    %v1480 = vpop.f32.mrf.mxu0
    %v1481 = vadd.f32 %v1257, %v1480
    %v1482 = vpop.f32.mrf.mxu0
    %1483 = vmatprep.mubr.f32.mxu0 %v1071
    %1484 = vmatmul.mubr.f32.gmra.mxu0 %v1070
    %v1485 = vpop.f32.mrf.mxu0
    %v1486 = vadd.f32 %v1262, %v1485
    %v1487 = vpop.f32.mrf.mxu0
    %1488 = vdwg.mxu0
    %v1489 = vmax.f32 %v1331, 0.0
    %v1490 = vmax.f32 %v1336, 0.0
    %v1491 = vmax.f32 %v1341, 0.0
    %v1492 = vmax.f32 %v1346, 0.0
    %v1493 = vmax.f32 %v1351, 0.0
    %v1494 = vmax.f32 %v1356, 0.0
    %v1495 = vmax.f32 %v1361, 0.0
    %v1496 = vmax.f32 %v1366, 0.0
    %v1497 = vmax.f32 %v1371, 0.0
    %v1498 = vmax.f32 %v1376, 0.0
    %v1499 = vmax.f32 %v1381, 0.0
    %v1500 = vmax.f32 %v1386, 0.0
    %v1501 = vmax.f32 %v1391, 0.0
    %v1502 = vmax.f32 %v1396, 0.0
    %v1503 = vmax.f32 %v1401, 0.0
    %v1504 = vmax.f32 %v1406, 0.0
    %v1505 = vmax.f32 %v1411, 0.0
    %v1506 = vmax.f32 %v1416, 0.0
    %v1507 = vmax.f32 %v1421, 0.0
    %v1508 = vmax.f32 %v1426, 0.0
    %v1509 = vmax.f32 %v1431, 0.0
    %v1510 = vmax.f32 %v1436, 0.0
    %v1511 = vmax.f32 %v1441, 0.0
    %v1512 = vmax.f32 %v1446, 0.0
    %v1513 = vmax.f32 %v1451, 0.0
    %v1514 = vmax.f32 %v1456, 0.0
    %v1515 = vmax.f32 %v1461, 0.0
    %v1516 = vmax.f32 %v1466, 0.0
    %v1517 = vmax.f32 %v1471, 0.0
    %v1518 = vmax.f32 %v1476, 0.0
    %v1519 = vmax.f32 %v1481, 0.0
    %v1520 = vmax.f32 %v1486, 0.0
    %v1521 = vld [vmem:[%s7] sm:$0xff]
    %v1522 = vld [vmem:[%s7 + $0x8] sm:$0xff]
    %v1523 = vld [vmem:[%s7 + $0x10] sm:$0xff]
    %v1524 = vld [vmem:[%s7 + $0x18] sm:$0xff]
    %v1525 = vld [vmem:[%s7 + $0x20] sm:$0xff]
    %v1526 = vld [vmem:[%s7 + $0x28] sm:$0xff]
    %v1527 = vld [vmem:[%s7 + $0x30] sm:$0xff]
    %v1528 = vld [vmem:[%s7 + $0x38] sm:$0xff]
    %v1529 = vld [vmem:[%s7 + $0x40] sm:$0xff]
    %v1530 = vld [vmem:[%s7 + $0x48] sm:$0xff]
    %v1531 = vld [vmem:[%s7 + $0x50] sm:$0xff]
    %v1532 = vld [vmem:[%s7 + $0x58] sm:$0xff]
    %v1533 = vld [vmem:[%s7 + $0x60] sm:$0xff]
    %v1534 = vld [vmem:[%s7 + $0x68] sm:$0xff]
    %v1535 = vld [vmem:[%s7 + $0x70] sm:$0xff]
    %v1536 = vld [vmem:[%s7 + $0x78] sm:$0xff]
    %v1537 = vld [vmem:[%s7 + $0x80] sm:$0xff]
    %v1538 = vld [vmem:[%s7 + $0x88] sm:$0xff]
    %v1539 = vld [vmem:[%s7 + $0x90] sm:$0xff]
    %v1540 = vld [vmem:[%s7 + $0x98] sm:$0xff]
    %v1541 = vld [vmem:[%s7 + $0xa0] sm:$0xff]
    %v1542 = vld [vmem:[%s7 + $0xa8] sm:$0xff]
    %v1543 = vld [vmem:[%s7 + $0xb0] sm:$0xff]
    %v1544 = vld [vmem:[%s7 + $0xb8] sm:$0xff]
    %v1545 = vld [vmem:[%s7 + $0xc0] sm:$0xff]
    %v1546 = vld [vmem:[%s7 + $0xc8] sm:$0xff]
    %v1547 = vld [vmem:[%s7 + $0xd0] sm:$0xff]
    %v1548 = vld [vmem:[%s7 + $0xd8] sm:$0xff]
    %v1549 = vld [vmem:[%s7 + $0xe0] sm:$0xff]
    %v1550 = vld [vmem:[%s7 + $0xe8] sm:$0xff]
    %v1551 = vld [vmem:[%s7 + $0xf0] sm:$0xff]
    %v1552 = vld [vmem:[%s7 + $0xf8] sm:$0xff]
    %1554 = vset.pattern.permute.xlu0 0
    %1555 = vperm.xlu0 %1554, %v1521
    %v1556 = vpop.permute.xlu0 %1555
    %1559 = vset.pattern.permute.xlu0 0
    %1560 = vperm.xlu0 %1559, %v1522
    %v1561 = vpop.permute.xlu0 %1560
    %1564 = vset.pattern.permute.xlu0 0
    %1565 = vperm.xlu0 %1564, %v1523
    %v1566 = vpop.permute.xlu0 %1565
    %1569 = vset.pattern.permute.xlu0 0
    %1570 = vperm.xlu0 %1569, %v1524
    %v1571 = vpop.permute.xlu0 %1570
    %1574 = vset.pattern.permute.xlu0 0
    %1575 = vperm.xlu0 %1574, %v1525
    %v1576 = vpop.permute.xlu0 %1575
    %1579 = vset.pattern.permute.xlu0 0
    %1580 = vperm.xlu0 %1579, %v1526
    %v1581 = vpop.permute.xlu0 %1580
    %1584 = vset.pattern.permute.xlu0 0
    %1585 = vperm.xlu0 %1584, %v1527
    %v1586 = vpop.permute.xlu0 %1585
    %1589 = vset.pattern.permute.xlu0 0
    %1590 = vperm.xlu0 %1589, %v1528
    %v1591 = vpop.permute.xlu0 %1590
    %1594 = vset.pattern.permute.xlu0 0
    %1595 = vperm.xlu0 %1594, %v1529
    %v1596 = vpop.permute.xlu0 %1595
    %1599 = vset.pattern.permute.xlu0 0
    %1600 = vperm.xlu0 %1599, %v1530
    %v1601 = vpop.permute.xlu0 %1600
    %1604 = vset.pattern.permute.xlu0 0
    %1605 = vperm.xlu0 %1604, %v1531
    %v1606 = vpop.permute.xlu0 %1605
    %1609 = vset.pattern.permute.xlu0 0
    %1610 = vperm.xlu0 %1609, %v1532
    %v1611 = vpop.permute.xlu0 %1610
    %1614 = vset.pattern.permute.xlu0 0
    %1615 = vperm.xlu0 %1614, %v1533
    %v1616 = vpop.permute.xlu0 %1615
    %1619 = vset.pattern.permute.xlu0 0
    %1620 = vperm.xlu0 %1619, %v1534
    %v1621 = vpop.permute.xlu0 %1620
    %1624 = vset.pattern.permute.xlu0 0
    %1625 = vperm.xlu0 %1624, %v1535
    %v1626 = vpop.permute.xlu0 %1625
    %1629 = vset.pattern.permute.xlu0 0
    %1630 = vperm.xlu0 %1629, %v1536
    %v1631 = vpop.permute.xlu0 %1630
    %1634 = vset.pattern.permute.xlu0 0
    %1635 = vperm.xlu0 %1634, %v1537
    %v1636 = vpop.permute.xlu0 %1635
    %1639 = vset.pattern.permute.xlu0 0
    %1640 = vperm.xlu0 %1639, %v1538
    %v1641 = vpop.permute.xlu0 %1640
    %1644 = vset.pattern.permute.xlu0 0
    %1645 = vperm.xlu0 %1644, %v1539
    %v1646 = vpop.permute.xlu0 %1645
    %1649 = vset.pattern.permute.xlu0 0
    %1650 = vperm.xlu0 %1649, %v1540
    %v1651 = vpop.permute.xlu0 %1650
    %1654 = vset.pattern.permute.xlu0 0
    %1655 = vperm.xlu0 %1654, %v1541
    %v1656 = vpop.permute.xlu0 %1655
    %1659 = vset.pattern.permute.xlu0 0
    %1660 = vperm.xlu0 %1659, %v1542
    %v1661 = vpop.permute.xlu0 %1660
    %1664 = vset.pattern.permute.xlu0 0
    %1665 = vperm.xlu0 %1664, %v1543
    %v1666 = vpop.permute.xlu0 %1665
    %1669 = vset.pattern.permute.xlu0 0
    %1670 = vperm.xlu0 %1669, %v1544
    %v1671 = vpop.permute.xlu0 %1670
    %1674 = vset.pattern.permute.xlu0 0
    %1675 = vperm.xlu0 %1674, %v1545
    %v1676 = vpop.permute.xlu0 %1675
    %1679 = vset.pattern.permute.xlu0 0
    %1680 = vperm.xlu0 %1679, %v1546
    %v1681 = vpop.permute.xlu0 %1680
    %1684 = vset.pattern.permute.xlu0 0
    %1685 = vperm.xlu0 %1684, %v1547
    %v1686 = vpop.permute.xlu0 %1685
    %1689 = vset.pattern.permute.xlu0 0
    %1690 = vperm.xlu0 %1689, %v1548
    %v1691 = vpop.permute.xlu0 %1690
    %1694 = vset.pattern.permute.xlu0 0
    %1695 = vperm.xlu0 %1694, %v1549
    %v1696 = vpop.permute.xlu0 %1695
    %1699 = vset.pattern.permute.xlu0 0
    %1700 = vperm.xlu0 %1699, %v1550
    %v1701 = vpop.permute.xlu0 %1700
    %1704 = vset.pattern.permute.xlu0 0
    %1705 = vperm.xlu0 %1704, %v1551
    %v1706 = vpop.permute.xlu0 %1705
    %1709 = vset.pattern.permute.xlu0 0
    %1710 = vperm.xlu0 %1709, %v1552
    %v1711 = vpop.permute.xlu0 %1710
    %v1713 = vmul.f32 %v1489, %v1556
    %v1714 = vmul.f32 %v1490, %v1561
    %v1715 = vmul.f32 %v1491, %v1566
    %v1716 = vmul.f32 %v1492, %v1571
    %v1717 = vmul.f32 %v1493, %v1576
    %v1718 = vmul.f32 %v1494, %v1581
    %v1719 = vmul.f32 %v1495, %v1586
    %v1720 = vmul.f32 %v1496, %v1591
    %v1721 = vmul.f32 %v1497, %v1596
    %v1722 = vmul.f32 %v1498, %v1601
    %v1723 = vmul.f32 %v1499, %v1606
    %v1724 = vmul.f32 %v1500, %v1611
    %v1725 = vmul.f32 %v1501, %v1616
    %v1726 = vmul.f32 %v1502, %v1621
    %v1727 = vmul.f32 %v1503, %v1626
    %v1728 = vmul.f32 %v1504, %v1631
    %v1729 = vmul.f32 %v1505, %v1636
    %v1730 = vmul.f32 %v1506, %v1641
    %v1731 = vmul.f32 %v1507, %v1646
    %v1732 = vmul.f32 %v1508, %v1651
    %v1733 = vmul.f32 %v1509, %v1656
    %v1734 = vmul.f32 %v1510, %v1661
    %v1735 = vmul.f32 %v1511, %v1666
    %v1736 = vmul.f32 %v1512, %v1671
    %v1737 = vmul.f32 %v1513, %v1676
    %v1738 = vmul.f32 %v1514, %v1681
    %v1739 = vmul.f32 %v1515, %v1686
    %v1740 = vmul.f32 %v1516, %v1691
    %v1741 = vmul.f32 %v1517, %v1696
    %v1742 = vmul.f32 %v1518, %v1701
    %v1743 = vmul.f32 %v1519, %v1706
    %v1744 = vmul.f32 %v1520, %v1711
    %vm1745 = vcmask 64512
    %v1746 = vsel %vm1745, %v1713, 0.0
    %v1747 = vsel %vm1745, %v1714, 0.0
    %v1748 = vadd.f32 %v1746, %v1747
    %v1749 = vsel %vm1745, %v1715, 0.0
    %v1750 = vadd.f32 %v1748, %v1749
    %v1751 = vsel %vm1745, %v1716, 0.0
    %v1752 = vadd.f32 %v1750, %v1751
    %v1753 = vsel %vm1745, %v1717, 0.0
    %v1754 = vadd.f32 %v1752, %v1753
    %v1755 = vsel %vm1745, %v1718, 0.0
    %v1756 = vadd.f32 %v1754, %v1755
    %v1757 = vsel %vm1745, %v1719, 0.0
    %v1758 = vadd.f32 %v1756, %v1757
    %v1759 = vsel %vm1745, %v1720, 0.0
    %v1760 = vadd.f32 %v1758, %v1759
    %v1761 = vsel %vm1745, %v1721, 0.0
    %v1762 = vadd.f32 %v1760, %v1761
    %v1763 = vsel %vm1745, %v1722, 0.0
    %v1764 = vadd.f32 %v1762, %v1763
    %v1765 = vsel %vm1745, %v1723, 0.0
    %v1766 = vadd.f32 %v1764, %v1765
    %v1767 = vsel %vm1745, %v1724, 0.0
    %v1768 = vadd.f32 %v1766, %v1767
    %v1769 = vsel %vm1745, %v1725, 0.0
    %v1770 = vadd.f32 %v1768, %v1769
    %v1771 = vsel %vm1745, %v1726, 0.0
    %v1772 = vadd.f32 %v1770, %v1771
    %v1773 = vsel %vm1745, %v1727, 0.0
    %v1774 = vadd.f32 %v1772, %v1773
    %v1775 = vsel %vm1745, %v1728, 0.0
    %v1776 = vadd.f32 %v1774, %v1775
    %v1777 = vsel %vm1745, %v1729, 0.0
    %v1778 = vadd.f32 %v1776, %v1777
    %v1779 = vsel %vm1745, %v1730, 0.0
    %v1780 = vadd.f32 %v1778, %v1779
    %v1781 = vsel %vm1745, %v1731, 0.0
    %v1782 = vadd.f32 %v1780, %v1781
    %v1783 = vsel %vm1745, %v1732, 0.0
    %v1784 = vadd.f32 %v1782, %v1783
    %v1785 = vsel %vm1745, %v1733, 0.0
    %v1786 = vadd.f32 %v1784, %v1785
    %v1787 = vsel %vm1745, %v1734, 0.0
    %v1788 = vadd.f32 %v1786, %v1787
    %v1789 = vsel %vm1745, %v1735, 0.0
    %v1790 = vadd.f32 %v1788, %v1789
    %v1791 = vsel %vm1745, %v1736, 0.0
    %v1792 = vadd.f32 %v1790, %v1791
    %v1793 = vsel %vm1745, %v1737, 0.0
    %v1794 = vadd.f32 %v1792, %v1793
    %v1795 = vsel %vm1745, %v1738, 0.0
    %v1796 = vadd.f32 %v1794, %v1795
    %v1797 = vsel %vm1745, %v1739, 0.0
    %v1798 = vadd.f32 %v1796, %v1797
    %v1799 = vsel %vm1745, %v1740, 0.0
    %v1800 = vadd.f32 %v1798, %v1799
    %v1801 = vsel %vm1745, %v1741, 0.0
    %v1802 = vadd.f32 %v1800, %v1801
    %v1803 = vsel %vm1745, %v1742, 0.0
    %v1804 = vadd.f32 %v1802, %v1803
    %v1805 = vsel %vm1745, %v1743, 0.0
    %v1806 = vadd.f32 %v1804, %v1805
    %v1807 = vsel %vm1745, %v1744, 0.0
    %v1808 = vadd.f32 %v1806, %v1807
    %v1809 = vrot.slane %v1808, 4
    %v1810 = vadd.f32 %v1808, %v1809
    %v1811 = vrot.slane %v1810, 2
    %v1812 = vadd.f32 %v1810, %v1811
    %v1813 = vrot.slane %v1812, 1
    %v1814 = vadd.f32 %v1812, %v1813
    %s1815 = sld [smem:[#allocation2]]
    %v1816 = vstv %s1815
    %v1817 = vadd.f32 %v1814, %v1816
    %vm1818 = vcmask 57344
    %1819 = vst.msk [vmem:[#allocation3] sm:$0x1] %vm1818, %v1817
    // Predicated region
    $region38: #{tpu_custom_call.1} parent=1 // pred_check
      _
    $region39: #{tpu_custom_call.1} parent=1 // pred_check_branch
      %1821 = sbr.rel (0) target = $region41
    $region40: #{tpu_custom_call.1} parent=1 // pred_region
      %s1823 = ssub.s32 16, 16
      %1824 = vsyncadd [#allocation4], %s1823
      %s1826 = sshll.u32 [#allocation3], 4
      %s1827 = int_to_ptr.vmem [resolvable:$true] %s1826
      %1829 = dma.vmem_to_hbm [thread:$0]  %s1827, 16, %s9, [#allocation4]
    $region41: #{tpu_custom_call.1} parent=1 // pred_fallthru
      _
    // Predicated region
    $region42: #{tpu_custom_call.1} parent=1 // pred_check
      _
    $region43: #{tpu_custom_call.1} parent=1 // pred_check_branch
      %1831 = sbr.rel (0) target = $region45
    $region44: #{tpu_custom_call.1} parent=1 // pred_region
      %1832 = dma.done [#allocation4], 16
    $region45: #{tpu_custom_call.1} parent=1 // pred_fallthru
      _
    %1833 = vsyncpa [#allocation4], 1

</llo_original>
